<compile_context>
chip_gen: v5e
topology: v5e:2x2
jax: 0.10.0
libtpu: 0.0.40
codegen_flags: <defaults>
</compile_context>

<pallas_src>
import functools
import math

import jax
import jax.numpy as jnp
import numpy as np
from jax import lax
from jax.experimental import pallas as pl
from jax.experimental.pallas import tpu as pltpu

LN_EPS = 1e-6
NEG_INF = -1e9


def _layer_norm(x, gamma, beta, eps):
    mean = jnp.mean(x, axis=-1, keepdims=True)
    var = jnp.mean((x - mean) ** 2, axis=-1, keepdims=True)
    return (x - mean) * lax.rsqrt(var + eps) * gamma + beta


# --------------------------- fused Pallas kernel ------------------------------

def _fused_encoder_kernel(
        # scalar prefetch
        xlens_ref,
        # inputs
        x_ref, we_ref, be_ref, pe_ref, gin_ref, bin_ref,
        ln1g_ref, ln1b_ref, wqkv_ref, bqkv_ref, wo_ref, bo_ref,
        ln2g_ref, ln2b_ref, w1_ref, b1_ref, w2_ref, b2_ref,
        gtop_ref, btop_ref,
        # output
        o_ref,
        # scratch: resident activation slab [T, D] (persists across layer axis)
        acc_ref,
        *, d_model, n_heads, eps):
    b = pl.program_id(0)
    l = pl.program_id(1)
    n_layers = pl.num_programs(1)
    T = acc_ref.shape[0]
    D = d_model
    dk = D // n_heads
    xlen = xlens_ref[b]

    # ---- phase 0 (first layer step only): embed + PE + norm_in --------------
    @pl.when(l == 0)
    def _():
        x_in = x_ref[0].astype(jnp.bfloat16)                        # [T, Din]
        h = jnp.dot(x_in, we_ref[...],
                    preferred_element_type=jnp.float32) + be_ref[...]
        h = h * jnp.float32(math.sqrt(d_model)) + pe_ref[...]       # pe_type='add'
        acc_ref[...] = _layer_norm(h, gin_ref[...], bin_ref[...], eps)

    # ---- one TransformerEncoderBlock (pre-LN attn + pre-LN FFN) -------------
    x = acc_ref[...]                                                # [T, D] f32

    # self-attention sublayer: x + Wo( MHA( LayerNorm(x) ) )
    xn = _layer_norm(x, ln1g_ref[0], ln1b_ref[0], eps)
    qkv = jnp.dot(xn.astype(jnp.bfloat16), wqkv_ref[0],             # fused QKV
                  preferred_element_type=jnp.float32) + bqkv_ref[0]  # [T, 3D]
    q = qkv[:, 0:D]
    k = qkv[:, D:2 * D]
    v = qkv[:, 2 * D:3 * D]

    key_mask = lax.broadcasted_iota(jnp.int32, (T, T), 1) < xlen    # mask keys
    scale = jnp.float32(1.0 / math.sqrt(dk))

    ctx_heads = []
    for h in range(n_heads):                                        # static unroll
        lo, hi = h * dk, (h + 1) * dk
        s = jnp.dot(q[:, lo:hi], k[:, lo:hi].T,
                    preferred_element_type=jnp.float32) * scale
        s = jnp.where(key_mask, s, jnp.float32(NEG_INF))
        s = s - jnp.max(s, axis=-1, keepdims=True)
        p = jnp.exp(s)
        p = p * pl.reciprocal(jnp.sum(p, axis=-1, keepdims=True), approx=True)
        ctx_heads.append(jnp.dot(p, v[:, lo:hi],
                                 preferred_element_type=jnp.float32))
    ctx = jnp.concatenate(ctx_heads, axis=-1)                       # [T, D]
    attn = jnp.dot(ctx.astype(jnp.bfloat16), wo_ref[0],             # single Wo
                   preferred_element_type=jnp.float32) + bo_ref[0]
    x = x + attn

    # feed-forward sublayer: x + W2( relu( W1( LayerNorm(x) ) ) )
    xn2 = _layer_norm(x, ln2g_ref[0], ln2b_ref[0], eps)
    h1 = jnp.dot(xn2.astype(jnp.bfloat16), w1_ref[0],
                 preferred_element_type=jnp.float32) + b1_ref[0]
    h1 = jnp.maximum(h1, 0.0)
    h2 = jnp.dot(h1.astype(jnp.bfloat16), w2_ref[0],
                 preferred_element_type=jnp.float32) + b2_ref[0]
    x = x + h2
    acc_ref[...] = x

    # ---- final phase (last layer step only): norm_top + write output --------
    @pl.when(l == n_layers - 1)
    def _():
        o_ref[0] = _layer_norm(x, gtop_ref[...], btop_ref[...], eps
                               ).astype(o_ref.dtype)


# --------------------------- wrapper ------------------------------------------

def _sinusoidal_pe(T, d_model):
    pos = jnp.arange(T, dtype=jnp.float32)[:, None]
    div = jnp.exp(jnp.arange(0, d_model, 2, dtype=jnp.float32)
                  * (-math.log(10000.0) / d_model))
    pe = jnp.zeros((T, d_model), jnp.float32)
    pe = pe.at[:, 0::2].set(jnp.sin(pos * div))
    pe = pe.at[:, 1::2].set(jnp.cos(pos * div))
    return pe


def transformer_encoder_forward(params, xs, xlens, *, d_model, n_heads,
                                eps=LN_EPS):
    """Mirrors TransformerEncoder.forward (conv=None, pe_type='add', bridge=None)."""
    B, T, Din = xs.shape
    n_layers = params["wqkv"].shape[0]
    d_ff = params["w1"].shape[2]
    pe = _sinusoidal_pe(T, d_model)

    kernel = functools.partial(_fused_encoder_kernel, d_model=d_model,
                               n_heads=n_heads, eps=eps)

    def const2(r, c):                       # shared across the whole grid
        return pl.BlockSpec((r, c), lambda b, l, xl: (0, 0))

    def per_layer(r, c):                    # stacked per-layer weights [L, r, c]
        return pl.BlockSpec((1, r, c), lambda b, l, xl: (l, 0, 0))

    in_specs = [
        pl.BlockSpec((1, T, Din), lambda b, l, xl: (b, 0, 0)),       # xs
        const2(Din, d_model),                                        # embed W (bf16)
        const2(1, d_model),                                          # embed b
        const2(T, d_model),                                          # pos. enc.
        const2(1, d_model), const2(1, d_model),                      # norm_in g/b
        per_layer(1, d_model), per_layer(1, d_model),                # ln1 g/b
        per_layer(d_model, 3 * d_model), per_layer(1, 3 * d_model),  # Wqkv, bqkv
        per_layer(d_model, d_model), per_layer(1, d_model),          # Wo, bo
        per_layer(1, d_model), per_layer(1, d_model),                # ln2 g/b
        per_layer(d_model, d_ff), per_layer(1, d_ff),                # W1, b1
        per_layer(d_ff, d_model), per_layer(1, d_model),             # W2, b2
        const2(1, d_model), const2(1, d_model),                      # norm_top g/b
    ]

    out = pl.pallas_call(
        kernel,
        out_shape=jax.ShapeDtypeStruct((B, T, d_model), jnp.float32),
        grid_spec=pltpu.PrefetchScalarGridSpec(
            num_scalar_prefetch=1,                                   # xlens -> SMEM
            grid=(B, n_layers),
            in_specs=in_specs,
            out_specs=pl.BlockSpec((1, T, d_model), lambda b, l, xl: (b, 0, 0)),
            scratch_shapes=[pltpu.VMEM((T, d_model), jnp.float32)],
        ),
        compiler_params=pltpu.CompilerParams(
            dimension_semantics=("parallel", "arbitrary")),
    )(xlens, xs,
      params["embed_w"], params["embed_b"], pe,
      params["norm_in_g"], params["norm_in_b"],
      params["ln1_g"], params["ln1_b"], params["wqkv"], params["bqkv"],
      params["wo"], params["bo"],
      params["ln2_g"], params["ln2_b"], params["w1"], params["b1"],
      params["w2"], params["b2"],
      params["norm_top_g"], params["norm_top_b"])

    eouts = {"ys": {"xs": out, "xlens": xlens},
             "ys_sub1": {"xs": None, "xlens": None},
             "ys_sub2": {"xs": None, "xlens": None}}
    return eouts


# --------------------------- params & reference -------------------------------

def init_params(key, input_dim, d_model, d_ff, n_layers):
    def xavier(k, shape):
        lim = math.sqrt(6.0 / (shape[0] + shape[1]))
        return jax.random.uniform(k, shape, jnp.float32, -lim, lim)

    keys = jax.random.split(key, 1 + n_layers)
    params = {
        # embed weight: normal(0, d_model**-0.5); biases 0 (per reset_parameters)
        "embed_w": (jax.random.normal(keys[0], (input_dim, d_model), jnp.float32)
                    * d_model ** -0.5).astype(jnp.bfloat16),
        "embed_b": jnp.zeros((1, d_model), jnp.float32),
        "norm_in_g": jnp.ones((1, d_model), jnp.float32),
        "norm_in_b": jnp.zeros((1, d_model), jnp.float32),
        "norm_top_g": jnp.ones((1, d_model), jnp.float32),
        "norm_top_b": jnp.zeros((1, d_model), jnp.float32),
    }
    wqkv, wo, w1, w2 = [], [], [], []
    for l in range(n_layers):
        lk = jax.random.split(keys[1 + l], 6)
        wq = xavier(lk[0], (d_model, d_model))
        wk = xavier(lk[1], (d_model, d_model))
        wv = xavier(lk[2], (d_model, d_model))
        wqkv.append(jnp.concatenate([wq, wk, wv], axis=1))
        wo.append(xavier(lk[3], (d_model, d_model)))
        w1.append(xavier(lk[4], (d_model, d_ff)))
        w2.append(xavier(lk[5], (d_ff, d_model)))
    params["wqkv"] = jnp.stack(wqkv).astype(jnp.bfloat16)
    params["bqkv"] = jnp.zeros((n_layers, 1, 3 * d_model), jnp.float32)
    params["wo"] = jnp.stack(wo).astype(jnp.bfloat16)
    params["bo"] = jnp.zeros((n_layers, 1, d_model), jnp.float32)
    params["w1"] = jnp.stack(w1).astype(jnp.bfloat16)
    params["b1"] = jnp.zeros((n_layers, 1, d_ff), jnp.float32)
    params["w2"] = jnp.stack(w2).astype(jnp.bfloat16)
    params["b2"] = jnp.zeros((n_layers, 1, d_model), jnp.float32)
    params["ln1_g"] = jnp.ones((n_layers, 1, d_model), jnp.float32)
    params["ln1_b"] = jnp.zeros((n_layers, 1, d_model), jnp.float32)
    params["ln2_g"] = jnp.ones((n_layers, 1, d_model), jnp.float32)
    params["ln2_b"] = jnp.zeros((n_layers, 1, d_model), jnp.float32)
    return params


def _ref_forward(params, xs, xlens, d_model, n_heads, eps=LN_EPS):
    """Pure-JAX reference (same bf16-weight / f32-accumulate matmul recipe)."""
    def ln(x, g, b):
        m = x.mean(-1, keepdims=True)
        v = ((x - m) ** 2).mean(-1, keepdims=True)
        return (x - m) / jnp.sqrt(v + eps) * g + b

    def bdot(a_f32, w_bf16):
        return jnp.dot(a_f32.astype(jnp.bfloat16), w_bf16,
                       preferred_element_type=jnp.float32)

    B, T, _ = xs.shape
    D = d_model
    dk = D // n_heads
    pe = _sinusoidal_pe(T, D)
    h = (bdot(xs, params["embed_w"]) + params["embed_b"]) * math.sqrt(D) + pe
    h = ln(h, params["norm_in_g"], params["norm_in_b"])
    mask = (jnp.arange(T)[None, :] < xlens[:, None])[:, None, None, :]   # [B,1,1,T]
    n_layers = params["wqkv"].shape[0]
    for l in range(n_layers):
        xn = ln(h, params["ln1_g"][l], params["ln1_b"][l])
        qkv = bdot(xn, params["wqkv"][l]) + params["bqkv"][l]
        q, k, v = qkv[..., :D], qkv[..., D:2 * D], qkv[..., 2 * D:]
        q = q.reshape(B, T, n_heads, dk).transpose(0, 2, 1, 3)
        k = k.reshape(B, T, n_heads, dk).transpose(0, 2, 1, 3)
        v = v.reshape(B, T, n_heads, dk).transpose(0, 2, 1, 3)
        s = jnp.einsum("bhqd,bhkd->bhqk", q, k,
                       preferred_element_type=jnp.float32) / math.sqrt(dk)
        s = jnp.where(mask, s, NEG_INF)
        p = jax.nn.softmax(s, axis=-1)
        ctx = jnp.einsum("bhqk,bhkd->bhqd", p, v,
                         preferred_element_type=jnp.float32
                         ).transpose(0, 2, 1, 3).reshape(B, T, D)
        h = h + bdot(ctx, params["wo"][l]) + params["bo"][l]
        xn2 = ln(h, params["ln2_g"][l], params["ln2_b"][l])
        h1 = jnp.maximum(bdot(xn2, params["w1"][l]) + params["b1"][l], 0.0)
        h = h + bdot(h1, params["w2"][l]) + params["b2"][l]
    return ln(h, params["norm_top_g"], params["norm_top_b"])


# --------------------------- main ---------------------------------------------

if __name__ == "__main__":
    B, T = 2, 8
    input_dim = 32          # == d_model == last_proj_dim  -> bridge is None
    d_model = 32
    d_ff = 64
    n_heads = 4
    n_layers = 2

    key = jax.random.PRNGKey(0)
    kx, kp = jax.random.split(key)
    xs = jax.random.normal(kx, (B, T, input_dim), jnp.float32)
    xlens = jnp.array([T, T - 2], jnp.int32)

    params = init_params(kp, input_dim, d_model, d_ff, n_layers)

    eouts = transformer_encoder_forward(params, xs, xlens,
                                        d_model=d_model, n_heads=n_heads)
    out = jax.block_until_ready(eouts["ys"]["xs"])

    ref = _ref_forward(params, xs, xlens, d_model, n_heads)
    np.testing.assert_allclose(np.asarray(out), np.asarray(ref),
                               rtol=2e-2, atol=2e-2)
    print("KERNEL_OK")
</pallas_src>

<mosaic_0001>
module attributes {stable_mosaic.version = 11 : i64} {
  func.func @_fused_encoder_kernel(%arg0: i32, %arg1: i32, %arg2: memref<2xi32, #tpu.memory_space<smem>>, %arg3: memref<1x8x32xf32, #tpu.memory_space<vmem>>, %arg4: memref<32x32xbf16, #tpu.memory_space<vmem>>, %arg5: memref<1x32xf32, #tpu.memory_space<vmem>>, %arg6: memref<8x32xf32, #tpu.memory_space<vmem>>, %arg7: memref<1x32xf32, #tpu.memory_space<vmem>>, %arg8: memref<1x32xf32, #tpu.memory_space<vmem>>, %arg9: memref<1x1x32xf32, #tpu.memory_space<vmem>>, %arg10: memref<1x1x32xf32, #tpu.memory_space<vmem>>, %arg11: memref<1x32x96xbf16, #tpu.memory_space<vmem>>, %arg12: memref<1x1x96xf32, #tpu.memory_space<vmem>>, %arg13: memref<1x32x32xbf16, #tpu.memory_space<vmem>>, %arg14: memref<1x1x32xf32, #tpu.memory_space<vmem>>, %arg15: memref<1x1x32xf32, #tpu.memory_space<vmem>>, %arg16: memref<1x1x32xf32, #tpu.memory_space<vmem>>, %arg17: memref<1x32x64xbf16, #tpu.memory_space<vmem>>, %arg18: memref<1x1x64xf32, #tpu.memory_space<vmem>>, %arg19: memref<1x64x32xbf16, #tpu.memory_space<vmem>>, %arg20: memref<1x1x32xf32, #tpu.memory_space<vmem>>, %arg21: memref<1x32xf32, #tpu.memory_space<vmem>>, %arg22: memref<1x32xf32, #tpu.memory_space<vmem>>, %arg23: memref<1x8x32xf32, #tpu.memory_space<vmem>>, %arg24: memref<8x32xf32, #tpu.memory_space<vmem>>) attributes {dimension_semantics = [#tpu.dimension_semantics<parallel>, #tpu.dimension_semantics<arbitrary>], iteration_bounds = array<i64: 2, 2>, scalar_prefetch = 1 : i64, scratch_operands = 1 : i64, tpu.core_type = #tpu.core_type<tc>, window_params = [{transform_indices = @transform_0, window_bounds = array<i64: 1, 8, 32>}, {pipeline_mode = #tpu.pipeline_mode<synchronous>, transform_indices = @transform_1, window_bounds = array<i64: 32, 32>}, {pipeline_mode = #tpu.pipeline_mode<synchronous>, transform_indices = @transform_2, window_bounds = array<i64: 1, 32>}, {pipeline_mode = #tpu.pipeline_mode<synchronous>, transform_indices = @transform_3, window_bounds = array<i64: 8, 32>}, {pipeline_mode = #tpu.pipeline_mode<synchronous>, transform_indices = @transform_4, window_bounds = array<i64: 1, 32>}, {pipeline_mode = #tpu.pipeline_mode<synchronous>, transform_indices = @transform_5, window_bounds = array<i64: 1, 32>}, {transform_indices = @transform_6, window_bounds = array<i64: 1, 1, 32>}, {transform_indices = @transform_7, window_bounds = array<i64: 1, 1, 32>}, {transform_indices = @transform_8, window_bounds = array<i64: 1, 32, 96>}, {transform_indices = @transform_9, window_bounds = array<i64: 1, 1, 96>}, {transform_indices = @transform_10, window_bounds = array<i64: 1, 32, 32>}, {transform_indices = @transform_11, window_bounds = array<i64: 1, 1, 32>}, {transform_indices = @transform_12, window_bounds = array<i64: 1, 1, 32>}, {transform_indices = @transform_13, window_bounds = array<i64: 1, 1, 32>}, {transform_indices = @transform_14, window_bounds = array<i64: 1, 32, 64>}, {transform_indices = @transform_15, window_bounds = array<i64: 1, 1, 64>}, {transform_indices = @transform_16, window_bounds = array<i64: 1, 64, 32>}, {transform_indices = @transform_17, window_bounds = array<i64: 1, 1, 32>}, {pipeline_mode = #tpu.pipeline_mode<synchronous>, transform_indices = @transform_18, window_bounds = array<i64: 1, 32>}, {pipeline_mode = #tpu.pipeline_mode<synchronous>, transform_indices = @transform_19, window_bounds = array<i64: 1, 32>}, {transform_indices = @transform_20, window_bounds = array<i64: 1, 8, 32>}]} {
    %0 = arith.index_cast %arg0 : i32 to index
    %1 = memref.load %arg2[%0] : memref<2xi32, #tpu.memory_space<smem>>
    %c0_i32 = arith.constant 0 : i32
    %2 = arith.cmpi eq, %arg1, %c0_i32 : i32
    %3 = arith.extui %2 : i1 to i32
    %c0_i32_0 = arith.constant 0 : i32
    %4 = arith.cmpi ne, %3, %c0_i32_0 : i32
    scf.if %4 {
      %c0_79 = arith.constant 0 : index
      %c0_80 = arith.constant 0 : index
      %c0_81 = arith.constant 0 : index
      %185 = vector.load %arg3[%c0_79, %c0_80, %c0_81] : memref<1x8x32xf32, #tpu.memory_space<vmem>>, vector<1x8x32xf32>
      %186 = vector.shape_cast %185 : vector<1x8x32xf32> to vector<8x32xf32>
      %187 = arith.truncf %186 : vector<8x32xf32> to vector<8x32xbf16>
      %c0_82 = arith.constant 0 : index
      %c0_83 = arith.constant 0 : index
      %188 = vector.load %arg4[%c0_82, %c0_83] : memref<32x32xbf16, #tpu.memory_space<vmem>>, vector<32x32xbf16>
      %cst_84 = arith.constant dense<0.000000e+00> : vector<8x32xf32>
      %189 = tpu.matmul %187, %188, %cst_84 {dimension_numbers = #tpu.dot_dimension_numbers<[1], [0], [0], [1], [0, 0, 1, 1], [], []>} : vector<8x32xbf16>, vector<32x32xbf16>, vector<8x32xf32> -> vector<8x32xf32>
      %c0_85 = arith.constant 0 : index
      %c0_86 = arith.constant 0 : index
      %190 = vector.load %arg5[%c0_85, %c0_86] : memref<1x32xf32, #tpu.memory_space<vmem>>, vector<1x32xf32>
      %191 = vector.broadcast %190 : vector<1x32xf32> to vector<8x32xf32>
      %192 = arith.addf %189, %191 : vector<8x32xf32>
      %cst_87 = arith.constant 5.65685415 : f32
      %193 = vector.broadcast %cst_87 : f32 to vector<8x32xf32>
      %194 = arith.mulf %192, %193 : vector<8x32xf32>
      %c0_88 = arith.constant 0 : index
      %c0_89 = arith.constant 0 : index
      %195 = vector.load %arg6[%c0_88, %c0_89] : memref<8x32xf32, #tpu.memory_space<vmem>>, vector<8x32xf32>
      %196 = arith.addf %194, %195 : vector<8x32xf32>
      %c0_90 = arith.constant 0 : index
      %c0_91 = arith.constant 0 : index
      %197 = vector.load %arg7[%c0_90, %c0_91] : memref<1x32xf32, #tpu.memory_space<vmem>>, vector<1x32xf32>
      %c0_92 = arith.constant 0 : index
      %c0_93 = arith.constant 0 : index
      %198 = vector.load %arg8[%c0_92, %c0_93] : memref<1x32xf32, #tpu.memory_space<vmem>>, vector<1x32xf32>
      %cst_94 = arith.constant dense<0.000000e+00> : vector<8xf32>
      %199 = vector.multi_reduction <add>, %196, %cst_94 [1] : vector<8x32xf32> to vector<8xf32>
      %200 = vector.shape_cast %199 : vector<8xf32> to vector<8x1xf32>
      %cst_95 = arith.constant 3.200000e+01 : f32
      %201 = vector.broadcast %cst_95 : f32 to vector<8x1xf32>
      %202 = arith.divf %200, %201 : vector<8x1xf32>
      %203 = vector.broadcast %202 : vector<8x1xf32> to vector<8x32xf32>
      %204 = arith.subf %196, %203 : vector<8x32xf32>
      %205 = arith.mulf %204, %204 : vector<8x32xf32>
      %cst_96 = arith.constant dense<0.000000e+00> : vector<8xf32>
      %206 = vector.multi_reduction <add>, %205, %cst_96 [1] : vector<8x32xf32> to vector<8xf32>
      %207 = vector.shape_cast %206 : vector<8xf32> to vector<8x1xf32>
      %cst_97 = arith.constant 3.200000e+01 : f32
      %208 = vector.broadcast %cst_97 : f32 to vector<8x1xf32>
      %209 = arith.divf %207, %208 : vector<8x1xf32>
      %210 = vector.broadcast %202 : vector<8x1xf32> to vector<8x32xf32>
      %211 = arith.subf %196, %210 : vector<8x32xf32>
      %cst_98 = arith.constant 9.99999997E-7 : f32
      %212 = vector.broadcast %cst_98 : f32 to vector<8x1xf32>
      %213 = arith.addf %209, %212 : vector<8x1xf32>
      %214 = math.rsqrt %213 : vector<8x1xf32>
      %215 = vector.broadcast %214 : vector<8x1xf32> to vector<8x32xf32>
      %216 = arith.mulf %211, %215 : vector<8x32xf32>
      %217 = vector.broadcast %197 : vector<1x32xf32> to vector<8x32xf32>
      %218 = arith.mulf %216, %217 : vector<8x32xf32>
      %219 = vector.broadcast %198 : vector<1x32xf32> to vector<8x32xf32>
      %220 = arith.addf %218, %219 : vector<8x32xf32>
      %c0_99 = arith.constant 0 : index
      %c0_100 = arith.constant 0 : index
      %221 = vector.load %arg24[%c0_99, %c0_100] : memref<8x32xf32, #tpu.memory_space<vmem>>, vector<8x32xf32>
      tpu.vector_store %arg24[%c0_99, %c0_100], %220 {strides = array<i32>} : memref<8x32xf32, #tpu.memory_space<vmem>>, vector<8x32xf32>,
    } else {
    }
    %c0 = arith.constant 0 : index
    %c0_1 = arith.constant 0 : index
    %5 = vector.load %arg24[%c0, %c0_1] : memref<8x32xf32, #tpu.memory_space<vmem>>, vector<8x32xf32>
    %c0_2 = arith.constant 0 : index
    %c0_3 = arith.constant 0 : index
    %c0_4 = arith.constant 0 : index
    %6 = vector.load %arg9[%c0_2, %c0_3, %c0_4] : memref<1x1x32xf32, #tpu.memory_space<vmem>>, vector<1x1x32xf32>
    %7 = vector.shape_cast %6 : vector<1x1x32xf32> to vector<1x32xf32>
    %c0_5 = arith.constant 0 : index
    %c0_6 = arith.constant 0 : index
    %c0_7 = arith.constant 0 : index
    %8 = vector.load %arg10[%c0_5, %c0_6, %c0_7] : memref<1x1x32xf32, #tpu.memory_space<vmem>>, vector<1x1x32xf32>
    %9 = vector.shape_cast %8 : vector<1x1x32xf32> to vector<1x32xf32>
    %cst = arith.constant dense<0.000000e+00> : vector<8xf32>
    %10 = vector.multi_reduction <add>, %5, %cst [1] : vector<8x32xf32> to vector<8xf32>
    %11 = vector.shape_cast %10 : vector<8xf32> to vector<8x1xf32>
    %cst_8 = arith.constant 3.200000e+01 : f32
    %12 = vector.broadcast %cst_8 : f32 to vector<8x1xf32>
    %13 = arith.divf %11, %12 : vector<8x1xf32>
    %14 = vector.broadcast %13 : vector<8x1xf32> to vector<8x32xf32>
    %15 = arith.subf %5, %14 : vector<8x32xf32>
    %16 = arith.mulf %15, %15 : vector<8x32xf32>
    %cst_9 = arith.constant dense<0.000000e+00> : vector<8xf32>
    %17 = vector.multi_reduction <add>, %16, %cst_9 [1] : vector<8x32xf32> to vector<8xf32>
    %18 = vector.shape_cast %17 : vector<8xf32> to vector<8x1xf32>
    %cst_10 = arith.constant 3.200000e+01 : f32
    %19 = vector.broadcast %cst_10 : f32 to vector<8x1xf32>
    %20 = arith.divf %18, %19 : vector<8x1xf32>
    %21 = vector.broadcast %13 : vector<8x1xf32> to vector<8x32xf32>
    %22 = arith.subf %5, %21 : vector<8x32xf32>
    %cst_11 = arith.constant 9.99999997E-7 : f32
    %23 = vector.broadcast %cst_11 : f32 to vector<8x1xf32>
    %24 = arith.addf %20, %23 : vector<8x1xf32>
    %25 = math.rsqrt %24 : vector<8x1xf32>
    %26 = vector.broadcast %25 : vector<8x1xf32> to vector<8x32xf32>
    %27 = arith.mulf %22, %26 : vector<8x32xf32>
    %28 = vector.broadcast %7 : vector<1x32xf32> to vector<8x32xf32>
    %29 = arith.mulf %27, %28 : vector<8x32xf32>
    %30 = vector.broadcast %9 : vector<1x32xf32> to vector<8x32xf32>
    %31 = arith.addf %29, %30 : vector<8x32xf32>
    %32 = arith.truncf %31 : vector<8x32xf32> to vector<8x32xbf16>
    %c0_12 = arith.constant 0 : index
    %c0_13 = arith.constant 0 : index
    %c0_14 = arith.constant 0 : index
    %33 = vector.load %arg11[%c0_12, %c0_13, %c0_14] : memref<1x32x96xbf16, #tpu.memory_space<vmem>>, vector<1x32x96xbf16>
    %34 = vector.shape_cast %33 : vector<1x32x96xbf16> to vector<32x96xbf16>
    %cst_15 = arith.constant dense<0.000000e+00> : vector<8x96xf32>
    %35 = tpu.matmul %32, %34, %cst_15 {dimension_numbers = #tpu.dot_dimension_numbers<[1], [0], [0], [1], [0, 0, 1, 1], [], []>} : vector<8x32xbf16>, vector<32x96xbf16>, vector<8x96xf32> -> vector<8x96xf32>
    %c0_16 = arith.constant 0 : index
    %c0_17 = arith.constant 0 : index
    %c0_18 = arith.constant 0 : index
    %36 = vector.load %arg12[%c0_16, %c0_17, %c0_18] : memref<1x1x96xf32, #tpu.memory_space<vmem>>, vector<1x1x96xf32>
    %37 = vector.shape_cast %36 : vector<1x1x96xf32> to vector<1x96xf32>
    %38 = vector.broadcast %37 : vector<1x96xf32> to vector<8x96xf32>
    %39 = arith.addf %35, %38 : vector<8x96xf32>
    %40 = vector.extract_strided_slice %39 {offsets = [0, 0], sizes = [8, 32], strides = [1, 1]} : vector<8x96xf32> to vector<8x32xf32>
    %41 = vector.extract_strided_slice %39 {offsets = [0, 32], sizes = [8, 32], strides = [1, 1]} : vector<8x96xf32> to vector<8x32xf32>
    %42 = vector.extract_strided_slice %39 {offsets = [0, 64], sizes = [8, 32], strides = [1, 1]} : vector<8x96xf32> to vector<8x32xf32>
    %43 = tpu.iota {dimensions = array<i32: 1>} : vector<8x8xi32>
    %44 = vector.broadcast %1 : i32 to vector<8x8xi32>
    %45 = arith.cmpi slt, %43, %44 : vector<8x8xi32>
    %46 = vector.extract_strided_slice %40 {offsets = [0, 0], sizes = [8, 8], strides = [1, 1]} : vector<8x32xf32> to vector<8x8xf32>
    %47 = vector.extract_strided_slice %41 {offsets = [0, 0], sizes = [8, 8], strides = [1, 1]} : vector<8x32xf32> to vector<8x8xf32>
    %48 = tpu.transpose %47, [1, 0] : vector<8x8xf32> -> vector<8x8xf32>
    %cst_19 = arith.constant dense<0.000000e+00> : vector<8x8xf32>
    %49 = tpu.matmul %46, %48, %cst_19 {dimension_numbers = #tpu.dot_dimension_numbers<[1], [0], [0], [1], [0, 0, 1, 1], [], []>} : vector<8x8xf32>, vector<8x8xf32>, vector<8x8xf32> -> vector<8x8xf32>
    %cst_20 = arith.constant 0.353553385 : f32
    %50 = vector.broadcast %cst_20 : f32 to vector<8x8xf32>
    %51 = arith.mulf %49, %50 : vector<8x8xf32>
    %cst_21 = arith.constant -1.000000e+09 : f32
    %52 = vector.broadcast %cst_21 : f32 to vector<8x8xf32>
    %53 = arith.select %45, %51, %52 : vector<8x8xi1>, vector<8x8xf32>
    %cst_22 = arith.constant dense<0xFF800000> : vector<8xf32>
    %54 = vector.multi_reduction <maximumf>, %53, %cst_22 [1] : vector<8x8xf32> to vector<8xf32>
    %55 = vector.shape_cast %54 : vector<8xf32> to vector<8x1xf32>
    %56 = vector.broadcast %55 : vector<8x1xf32> to vector<8x8xf32>
    %57 = arith.subf %53, %56 : vector<8x8xf32>
    %58 = math.exp %57 : vector<8x8xf32>
    %cst_23 = arith.constant dense<0.000000e+00> : vector<8xf32>
    %59 = vector.multi_reduction <add>, %58, %cst_23 [1] : vector<8x8xf32> to vector<8xf32>
    %60 = vector.shape_cast %59 : vector<8xf32> to vector<8x1xf32>
    %61 = tpu.reciprocal %60 {approx = true} : vector<8x1xf32> -> vector<8x1xf32>
    %62 = vector.broadcast %61 : vector<8x1xf32> to vector<8x8xf32>
    %63 = arith.mulf %58, %62 : vector<8x8xf32>
    %64 = vector.extract_strided_slice %42 {offsets = [0, 0], sizes = [8, 8], strides = [1, 1]} : vector<8x32xf32> to vector<8x8xf32>
    %cst_24 = arith.constant dense<0.000000e+00> : vector<8x8xf32>
    %65 = tpu.matmul %63, %64, %cst_24 {dimension_numbers = #tpu.dot_dimension_numbers<[1], [0], [0], [1], [0, 0, 1, 1], [], []>} : vector<8x8xf32>, vector<8x8xf32>, vector<8x8xf32> -> vector<8x8xf32>
    %66 = vector.extract_strided_slice %40 {offsets = [0, 8], sizes = [8, 8], strides = [1, 1]} : vector<8x32xf32> to vector<8x8xf32>
    %67 = vector.extract_strided_slice %41 {offsets = [0, 8], sizes = [8, 8], strides = [1, 1]} : vector<8x32xf32> to vector<8x8xf32>
    %68 = tpu.transpose %67, [1, 0] : vector<8x8xf32> -> vector<8x8xf32>
    %cst_25 = arith.constant dense<0.000000e+00> : vector<8x8xf32>
    %69 = tpu.matmul %66, %68, %cst_25 {dimension_numbers = #tpu.dot_dimension_numbers<[1], [0], [0], [1], [0, 0, 1, 1], [], []>} : vector<8x8xf32>, vector<8x8xf32>, vector<8x8xf32> -> vector<8x8xf32>
    %cst_26 = arith.constant 0.353553385 : f32
    %70 = vector.broadcast %cst_26 : f32 to vector<8x8xf32>
    %71 = arith.mulf %69, %70 : vector<8x8xf32>
    %cst_27 = arith.constant -1.000000e+09 : f32
    %72 = vector.broadcast %cst_27 : f32 to vector<8x8xf32>
    %73 = arith.select %45, %71, %72 : vector<8x8xi1>, vector<8x8xf32>
    %cst_28 = arith.constant dense<0xFF800000> : vector<8xf32>
    %74 = vector.multi_reduction <maximumf>, %73, %cst_28 [1] : vector<8x8xf32> to vector<8xf32>
    %75 = vector.shape_cast %74 : vector<8xf32> to vector<8x1xf32>
    %76 = vector.broadcast %75 : vector<8x1xf32> to vector<8x8xf32>
    %77 = arith.subf %73, %76 : vector<8x8xf32>
    %78 = math.exp %77 : vector<8x8xf32>
    %cst_29 = arith.constant dense<0.000000e+00> : vector<8xf32>
    %79 = vector.multi_reduction <add>, %78, %cst_29 [1] : vector<8x8xf32> to vector<8xf32>
    %80 = vector.shape_cast %79 : vector<8xf32> to vector<8x1xf32>
    %81 = tpu.reciprocal %80 {approx = true} : vector<8x1xf32> -> vector<8x1xf32>
    %82 = vector.broadcast %81 : vector<8x1xf32> to vector<8x8xf32>
    %83 = arith.mulf %78, %82 : vector<8x8xf32>
    %84 = vector.extract_strided_slice %42 {offsets = [0, 8], sizes = [8, 8], strides = [1, 1]} : vector<8x32xf32> to vector<8x8xf32>
    %cst_30 = arith.constant dense<0.000000e+00> : vector<8x8xf32>
    %85 = tpu.matmul %83, %84, %cst_30 {dimension_numbers = #tpu.dot_dimension_numbers<[1], [0], [0], [1], [0, 0, 1, 1], [], []>} : vector<8x8xf32>, vector<8x8xf32>, vector<8x8xf32> -> vector<8x8xf32>
    %86 = vector.extract_strided_slice %40 {offsets = [0, 16], sizes = [8, 8], strides = [1, 1]} : vector<8x32xf32> to vector<8x8xf32>
    %87 = vector.extract_strided_slice %41 {offsets = [0, 16], sizes = [8, 8], strides = [1, 1]} : vector<8x32xf32> to vector<8x8xf32>
    %88 = tpu.transpose %87, [1, 0] : vector<8x8xf32> -> vector<8x8xf32>
    %cst_31 = arith.constant dense<0.000000e+00> : vector<8x8xf32>
    %89 = tpu.matmul %86, %88, %cst_31 {dimension_numbers = #tpu.dot_dimension_numbers<[1], [0], [0], [1], [0, 0, 1, 1], [], []>} : vector<8x8xf32>, vector<8x8xf32>, vector<8x8xf32> -> vector<8x8xf32>
    %cst_32 = arith.constant 0.353553385 : f32
    %90 = vector.broadcast %cst_32 : f32 to vector<8x8xf32>
    %91 = arith.mulf %89, %90 : vector<8x8xf32>
    %cst_33 = arith.constant -1.000000e+09 : f32
    %92 = vector.broadcast %cst_33 : f32 to vector<8x8xf32>
    %93 = arith.select %45, %91, %92 : vector<8x8xi1>, vector<8x8xf32>
    %cst_34 = arith.constant dense<0xFF800000> : vector<8xf32>
    %94 = vector.multi_reduction <maximumf>, %93, %cst_34 [1] : vector<8x8xf32> to vector<8xf32>
    %95 = vector.shape_cast %94 : vector<8xf32> to vector<8x1xf32>
    %96 = vector.broadcast %95 : vector<8x1xf32> to vector<8x8xf32>
    %97 = arith.subf %93, %96 : vector<8x8xf32>
    %98 = math.exp %97 : vector<8x8xf32>
    %cst_35 = arith.constant dense<0.000000e+00> : vector<8xf32>
    %99 = vector.multi_reduction <add>, %98, %cst_35 [1] : vector<8x8xf32> to vector<8xf32>
    %100 = vector.shape_cast %99 : vector<8xf32> to vector<8x1xf32>
    %101 = tpu.reciprocal %100 {approx = true} : vector<8x1xf32> -> vector<8x1xf32>
    %102 = vector.broadcast %101 : vector<8x1xf32> to vector<8x8xf32>
    %103 = arith.mulf %98, %102 : vector<8x8xf32>
    %104 = vector.extract_strided_slice %42 {offsets = [0, 16], sizes = [8, 8], strides = [1, 1]} : vector<8x32xf32> to vector<8x8xf32>
    %cst_36 = arith.constant dense<0.000000e+00> : vector<8x8xf32>
    %105 = tpu.matmul %103, %104, %cst_36 {dimension_numbers = #tpu.dot_dimension_numbers<[1], [0], [0], [1], [0, 0, 1, 1], [], []>} : vector<8x8xf32>, vector<8x8xf32>, vector<8x8xf32> -> vector<8x8xf32>
    %106 = vector.extract_strided_slice %40 {offsets = [0, 24], sizes = [8, 8], strides = [1, 1]} : vector<8x32xf32> to vector<8x8xf32>
    %107 = vector.extract_strided_slice %41 {offsets = [0, 24], sizes = [8, 8], strides = [1, 1]} : vector<8x32xf32> to vector<8x8xf32>
    %108 = tpu.transpose %107, [1, 0] : vector<8x8xf32> -> vector<8x8xf32>
    %cst_37 = arith.constant dense<0.000000e+00> : vector<8x8xf32>
    %109 = tpu.matmul %106, %108, %cst_37 {dimension_numbers = #tpu.dot_dimension_numbers<[1], [0], [0], [1], [0, 0, 1, 1], [], []>} : vector<8x8xf32>, vector<8x8xf32>, vector<8x8xf32> -> vector<8x8xf32>
    %cst_38 = arith.constant 0.353553385 : f32
    %110 = vector.broadcast %cst_38 : f32 to vector<8x8xf32>
    %111 = arith.mulf %109, %110 : vector<8x8xf32>
    %cst_39 = arith.constant -1.000000e+09 : f32
    %112 = vector.broadcast %cst_39 : f32 to vector<8x8xf32>
    %113 = arith.select %45, %111, %112 : vector<8x8xi1>, vector<8x8xf32>
    %cst_40 = arith.constant dense<0xFF800000> : vector<8xf32>
    %114 = vector.multi_reduction <maximumf>, %113, %cst_40 [1] : vector<8x8xf32> to vector<8xf32>
    %115 = vector.shape_cast %114 : vector<8xf32> to vector<8x1xf32>
    %116 = vector.broadcast %115 : vector<8x1xf32> to vector<8x8xf32>
    %117 = arith.subf %113, %116 : vector<8x8xf32>
    %118 = math.exp %117 : vector<8x8xf32>
    %cst_41 = arith.constant dense<0.000000e+00> : vector<8xf32>
    %119 = vector.multi_reduction <add>, %118, %cst_41 [1] : vector<8x8xf32> to vector<8xf32>
    %120 = vector.shape_cast %119 : vector<8xf32> to vector<8x1xf32>
    %121 = tpu.reciprocal %120 {approx = true} : vector<8x1xf32> -> vector<8x1xf32>
    %122 = vector.broadcast %121 : vector<8x1xf32> to vector<8x8xf32>
    %123 = arith.mulf %118, %122 : vector<8x8xf32>
    %124 = vector.extract_strided_slice %42 {offsets = [0, 24], sizes = [8, 8], strides = [1, 1]} : vector<8x32xf32> to vector<8x8xf32>
    %cst_42 = arith.constant dense<0.000000e+00> : vector<8x8xf32>
    %125 = tpu.matmul %123, %124, %cst_42 {dimension_numbers = #tpu.dot_dimension_numbers<[1], [0], [0], [1], [0, 0, 1, 1], [], []>} : vector<8x8xf32>, vector<8x8xf32>, vector<8x8xf32> -> vector<8x8xf32>
    %126 = tpu.concatenate %65, %85, %105, %125 in 1 : vector<8x8xf32>, vector<8x8xf32>, vector<8x8xf32>, vector<8x8xf32> -> vector<8x32xf32>
    %127 = arith.truncf %126 : vector<8x32xf32> to vector<8x32xbf16>
    %c0_43 = arith.constant 0 : index
    %c0_44 = arith.constant 0 : index
    %c0_45 = arith.constant 0 : index
    %128 = vector.load %arg13[%c0_43, %c0_44, %c0_45] : memref<1x32x32xbf16, #tpu.memory_space<vmem>>, vector<1x32x32xbf16>
    %129 = vector.shape_cast %128 : vector<1x32x32xbf16> to vector<32x32xbf16>
    %cst_46 = arith.constant dense<0.000000e+00> : vector<8x32xf32>
    %130 = tpu.matmul %127, %129, %cst_46 {dimension_numbers = #tpu.dot_dimension_numbers<[1], [0], [0], [1], [0, 0, 1, 1], [], []>} : vector<8x32xbf16>, vector<32x32xbf16>, vector<8x32xf32> -> vector<8x32xf32>
    %c0_47 = arith.constant 0 : index
    %c0_48 = arith.constant 0 : index
    %c0_49 = arith.constant 0 : index
    %131 = vector.load %arg14[%c0_47, %c0_48, %c0_49] : memref<1x1x32xf32, #tpu.memory_space<vmem>>, vector<1x1x32xf32>
    %132 = vector.shape_cast %131 : vector<1x1x32xf32> to vector<1x32xf32>
    %133 = vector.broadcast %132 : vector<1x32xf32> to vector<8x32xf32>
    %134 = arith.addf %130, %133 : vector<8x32xf32>
    %135 = arith.addf %5, %134 : vector<8x32xf32>
    %c0_50 = arith.constant 0 : index
    %c0_51 = arith.constant 0 : index
    %c0_52 = arith.constant 0 : index
    %136 = vector.load %arg15[%c0_50, %c0_51, %c0_52] : memref<1x1x32xf32, #tpu.memory_space<vmem>>, vector<1x1x32xf32>
    %137 = vector.shape_cast %136 : vector<1x1x32xf32> to vector<1x32xf32>
    %c0_53 = arith.constant 0 : index
    %c0_54 = arith.constant 0 : index
    %c0_55 = arith.constant 0 : index
    %138 = vector.load %arg16[%c0_53, %c0_54, %c0_55] : memref<1x1x32xf32, #tpu.memory_space<vmem>>, vector<1x1x32xf32>
    %139 = vector.shape_cast %138 : vector<1x1x32xf32> to vector<1x32xf32>
    %cst_56 = arith.constant dense<0.000000e+00> : vector<8xf32>
    %140 = vector.multi_reduction <add>, %135, %cst_56 [1] : vector<8x32xf32> to vector<8xf32>
    %141 = vector.shape_cast %140 : vector<8xf32> to vector<8x1xf32>
    %cst_57 = arith.constant 3.200000e+01 : f32
    %142 = vector.broadcast %cst_57 : f32 to vector<8x1xf32>
    %143 = arith.divf %141, %142 : vector<8x1xf32>
    %144 = vector.broadcast %143 : vector<8x1xf32> to vector<8x32xf32>
    %145 = arith.subf %135, %144 : vector<8x32xf32>
    %146 = arith.mulf %145, %145 : vector<8x32xf32>
    %cst_58 = arith.constant dense<0.000000e+00> : vector<8xf32>
    %147 = vector.multi_reduction <add>, %146, %cst_58 [1] : vector<8x32xf32> to vector<8xf32>
    %148 = vector.shape_cast %147 : vector<8xf32> to vector<8x1xf32>
    %cst_59 = arith.constant 3.200000e+01 : f32
    %149 = vector.broadcast %cst_59 : f32 to vector<8x1xf32>
    %150 = arith.divf %148, %149 : vector<8x1xf32>
    %151 = vector.broadcast %143 : vector<8x1xf32> to vector<8x32xf32>
    %152 = arith.subf %135, %151 : vector<8x32xf32>
    %cst_60 = arith.constant 9.99999997E-7 : f32
    %153 = vector.broadcast %cst_60 : f32 to vector<8x1xf32>
    %154 = arith.addf %150, %153 : vector<8x1xf32>
    %155 = math.rsqrt %154 : vector<8x1xf32>
    %156 = vector.broadcast %155 : vector<8x1xf32> to vector<8x32xf32>
    %157 = arith.mulf %152, %156 : vector<8x32xf32>
    %158 = vector.broadcast %137 : vector<1x32xf32> to vector<8x32xf32>
    %159 = arith.mulf %157, %158 : vector<8x32xf32>
    %160 = vector.broadcast %139 : vector<1x32xf32> to vector<8x32xf32>
    %161 = arith.addf %159, %160 : vector<8x32xf32>
    %162 = arith.truncf %161 : vector<8x32xf32> to vector<8x32xbf16>
    %c0_61 = arith.constant 0 : index
    %c0_62 = arith.constant 0 : index
    %c0_63 = arith.constant 0 : index
    %163 = vector.load %arg17[%c0_61, %c0_62, %c0_63] : memref<1x32x64xbf16, #tpu.memory_space<vmem>>, vector<1x32x64xbf16>
    %164 = vector.shape_cast %163 : vector<1x32x64xbf16> to vector<32x64xbf16>
    %cst_64 = arith.constant dense<0.000000e+00> : vector<8x64xf32>
    %165 = tpu.matmul %162, %164, %cst_64 {dimension_numbers = #tpu.dot_dimension_numbers<[1], [0], [0], [1], [0, 0, 1, 1], [], []>} : vector<8x32xbf16>, vector<32x64xbf16>, vector<8x64xf32> -> vector<8x64xf32>
    %c0_65 = arith.constant 0 : index
    %c0_66 = arith.constant 0 : index
    %c0_67 = arith.constant 0 : index
    %166 = vector.load %arg18[%c0_65, %c0_66, %c0_67] : memref<1x1x64xf32, #tpu.memory_space<vmem>>, vector<1x1x64xf32>
    %167 = vector.shape_cast %166 : vector<1x1x64xf32> to vector<1x64xf32>
    %168 = vector.broadcast %167 : vector<1x64xf32> to vector<8x64xf32>
    %169 = arith.addf %165, %168 : vector<8x64xf32>
    %cst_68 = arith.constant 0.000000e+00 : f32
    %170 = vector.broadcast %cst_68 : f32 to vector<8x64xf32>
    %171 = arith.maximumf %169, %170 : vector<8x64xf32>
    %172 = arith.truncf %171 : vector<8x64xf32> to vector<8x64xbf16>
    %c0_69 = arith.constant 0 : index
    %c0_70 = arith.constant 0 : index
    %c0_71 = arith.constant 0 : index
    %173 = vector.load %arg19[%c0_69, %c0_70, %c0_71] : memref<1x64x32xbf16, #tpu.memory_space<vmem>>, vector<1x64x32xbf16>
    %174 = vector.shape_cast %173 : vector<1x64x32xbf16> to vector<64x32xbf16>
    %cst_72 = arith.constant dense<0.000000e+00> : vector<8x32xf32>
    %175 = tpu.matmul %172, %174, %cst_72 {dimension_numbers = #tpu.dot_dimension_numbers<[1], [0], [0], [1], [0, 0, 1, 1], [], []>} : vector<8x64xbf16>, vector<64x32xbf16>, vector<8x32xf32> -> vector<8x32xf32>
    %c0_73 = arith.constant 0 : index
    %c0_74 = arith.constant 0 : index
    %c0_75 = arith.constant 0 : index
    %176 = vector.load %arg20[%c0_73, %c0_74, %c0_75] : memref<1x1x32xf32, #tpu.memory_space<vmem>>, vector<1x1x32xf32>
    %177 = vector.shape_cast %176 : vector<1x1x32xf32> to vector<1x32xf32>
    %178 = vector.broadcast %177 : vector<1x32xf32> to vector<8x32xf32>
    %179 = arith.addf %175, %178 : vector<8x32xf32>
    %180 = arith.addf %135, %179 : vector<8x32xf32>
    %c0_76 = arith.constant 0 : index
    %c0_77 = arith.constant 0 : index
    %181 = vector.load %arg24[%c0_76, %c0_77] : memref<8x32xf32, #tpu.memory_space<vmem>>, vector<8x32xf32>
    tpu.vector_store %arg24[%c0_76, %c0_77], %180 {strides = array<i32>} : memref<8x32xf32, #tpu.memory_space<vmem>>, vector<8x32xf32>,
    %c1_i32 = arith.constant 1 : i32
    %182 = arith.cmpi eq, %arg1, %c1_i32 : i32
    %183 = arith.extui %182 : i1 to i32
    %c0_i32_78 = arith.constant 0 : i32
    %184 = arith.cmpi ne, %183, %c0_i32_78 : i32
    scf.if %184 {
      %c0_79 = arith.constant 0 : index
      %c0_80 = arith.constant 0 : index
      %185 = vector.load %arg21[%c0_79, %c0_80] : memref<1x32xf32, #tpu.memory_space<vmem>>, vector<1x32xf32>
      %c0_81 = arith.constant 0 : index
      %c0_82 = arith.constant 0 : index
      %186 = vector.load %arg22[%c0_81, %c0_82] : memref<1x32xf32, #tpu.memory_space<vmem>>, vector<1x32xf32>
      %cst_83 = arith.constant dense<0.000000e+00> : vector<8xf32>
      %187 = vector.multi_reduction <add>, %180, %cst_83 [1] : vector<8x32xf32> to vector<8xf32>
      %188 = vector.shape_cast %187 : vector<8xf32> to vector<8x1xf32>
      %cst_84 = arith.constant 3.200000e+01 : f32
      %189 = vector.broadcast %cst_84 : f32 to vector<8x1xf32>
      %190 = arith.divf %188, %189 : vector<8x1xf32>
      %191 = vector.broadcast %190 : vector<8x1xf32> to vector<8x32xf32>
      %192 = arith.subf %180, %191 : vector<8x32xf32>
      %193 = arith.mulf %192, %192 : vector<8x32xf32>
      %cst_85 = arith.constant dense<0.000000e+00> : vector<8xf32>
      %194 = vector.multi_reduction <add>, %193, %cst_85 [1] : vector<8x32xf32> to vector<8xf32>
      %195 = vector.shape_cast %194 : vector<8xf32> to vector<8x1xf32>
      %cst_86 = arith.constant 3.200000e+01 : f32
      %196 = vector.broadcast %cst_86 : f32 to vector<8x1xf32>
      %197 = arith.divf %195, %196 : vector<8x1xf32>
      %198 = vector.broadcast %190 : vector<8x1xf32> to vector<8x32xf32>
      %199 = arith.subf %180, %198 : vector<8x32xf32>
      %cst_87 = arith.constant 9.99999997E-7 : f32
      %200 = vector.broadcast %cst_87 : f32 to vector<8x1xf32>
      %201 = arith.addf %197, %200 : vector<8x1xf32>
      %202 = math.rsqrt %201 : vector<8x1xf32>
      %203 = vector.broadcast %202 : vector<8x1xf32> to vector<8x32xf32>
      %204 = arith.mulf %199, %203 : vector<8x32xf32>
      %205 = vector.broadcast %185 : vector<1x32xf32> to vector<8x32xf32>
      %206 = arith.mulf %204, %205 : vector<8x32xf32>
      %207 = vector.broadcast %186 : vector<1x32xf32> to vector<8x32xf32>
      %208 = arith.addf %206, %207 : vector<8x32xf32>
      %c0_88 = arith.constant 0 : index
      %c0_89 = arith.constant 0 : index
      %c0_90 = arith.constant 0 : index
      %209 = vector.load %arg23[%c0_88, %c0_89, %c0_90] : memref<1x8x32xf32, #tpu.memory_space<vmem>>, vector<1x8x32xf32>
      %210 = vector.shape_cast %209 : vector<1x8x32xf32> to vector<8x32xf32>
      %211 = vector.shape_cast %208 : vector<8x32xf32> to vector<1x8x32xf32>
      tpu.vector_store %arg23[%c0_88, %c0_89, %c0_90], %211 {strides = array<i32>} : memref<1x8x32xf32, #tpu.memory_space<vmem>>, vector<1x8x32xf32>,
    } else {
    }
    return
  }
  func.func @transform_0(%arg0: i32, %arg1: i32, %arg2: memref<2xi32, #tpu.memory_space<smem>>) -> (i32, i32, i32) {
    %c0_i32 = arith.constant 0 : i32
    %c0_i32_0 = arith.constant 0 : i32
    %c0_i32_1 = arith.constant 0 : i32
    return %arg0, %c0_i32, %c0_i32_0 : i32, i32, i32
  }
  func.func @transform_1(%arg0: i32, %arg1: i32, %arg2: memref<2xi32, #tpu.memory_space<smem>>) -> (i32, i32) {
    %c0_i32 = arith.constant 0 : i32
    %c0_i32_0 = arith.constant 0 : i32
    %c0_i32_1 = arith.constant 0 : i32
    return %c0_i32, %c0_i32_0 : i32, i32
  }
  func.func @transform_2(%arg0: i32, %arg1: i32, %arg2: memref<2xi32, #tpu.memory_space<smem>>) -> (i32, i32) {
    %c0_i32 = arith.constant 0 : i32
    %c0_i32_0 = arith.constant 0 : i32
    %c0_i32_1 = arith.constant 0 : i32
    return %c0_i32, %c0_i32_0 : i32, i32
  }
  func.func @transform_3(%arg0: i32, %arg1: i32, %arg2: memref<2xi32, #tpu.memory_space<smem>>) -> (i32, i32) {
    %c0_i32 = arith.constant 0 : i32
    %c0_i32_0 = arith.constant 0 : i32
    %c0_i32_1 = arith.constant 0 : i32
    return %c0_i32, %c0_i32_0 : i32, i32
  }
  func.func @transform_4(%arg0: i32, %arg1: i32, %arg2: memref<2xi32, #tpu.memory_space<smem>>) -> (i32, i32) {
    %c0_i32 = arith.constant 0 : i32
    %c0_i32_0 = arith.constant 0 : i32
    %c0_i32_1 = arith.constant 0 : i32
    return %c0_i32, %c0_i32_0 : i32, i32
  }
  func.func @transform_5(%arg0: i32, %arg1: i32, %arg2: memref<2xi32, #tpu.memory_space<smem>>) -> (i32, i32) {
    %c0_i32 = arith.constant 0 : i32
    %c0_i32_0 = arith.constant 0 : i32
    %c0_i32_1 = arith.constant 0 : i32
    return %c0_i32, %c0_i32_0 : i32, i32
  }
  func.func @transform_6(%arg0: i32, %arg1: i32, %arg2: memref<2xi32, #tpu.memory_space<smem>>) -> (i32, i32, i32) {
    %c0_i32 = arith.constant 0 : i32
    %c0_i32_0 = arith.constant 0 : i32
    %c0_i32_1 = arith.constant 0 : i32
    return %arg1, %c0_i32, %c0_i32_0 : i32, i32, i32
  }
  func.func @transform_7(%arg0: i32, %arg1: i32, %arg2: memref<2xi32, #tpu.memory_space<smem>>) -> (i32, i32, i32) {
    %c0_i32 = arith.constant 0 : i32
    %c0_i32_0 = arith.constant 0 : i32
    %c0_i32_1 = arith.constant 0 : i32
    return %arg1, %c0_i32, %c0_i32_0 : i32, i32, i32
  }
  func.func @transform_8(%arg0: i32, %arg1: i32, %arg2: memref<2xi32, #tpu.memory_space<smem>>) -> (i32, i32, i32) {
    %c0_i32 = arith.constant 0 : i32
    %c0_i32_0 = arith.constant 0 : i32
    %c0_i32_1 = arith.constant 0 : i32
    return %arg1, %c0_i32, %c0_i32_0 : i32, i32, i32
  }
  func.func @transform_9(%arg0: i32, %arg1: i32, %arg2: memref<2xi32, #tpu.memory_space<smem>>) -> (i32, i32, i32) {
    %c0_i32 = arith.constant 0 : i32
    %c0_i32_0 = arith.constant 0 : i32
    %c0_i32_1 = arith.constant 0 : i32
    return %arg1, %c0_i32, %c0_i32_0 : i32, i32, i32
  }
  func.func @transform_10(%arg0: i32, %arg1: i32, %arg2: memref<2xi32, #tpu.memory_space<smem>>) -> (i32, i32, i32) {
    %c0_i32 = arith.constant 0 : i32
    %c0_i32_0 = arith.constant 0 : i32
    %c0_i32_1 = arith.constant 0 : i32
    return %arg1, %c0_i32, %c0_i32_0 : i32, i32, i32
  }
  func.func @transform_11(%arg0: i32, %arg1: i32, %arg2: memref<2xi32, #tpu.memory_space<smem>>) -> (i32, i32, i32) {
    %c0_i32 = arith.constant 0 : i32
    %c0_i32_0 = arith.constant 0 : i32
    %c0_i32_1 = arith.constant 0 : i32
    return %arg1, %c0_i32, %c0_i32_0 : i32, i32, i32
  }
  func.func @transform_12(%arg0: i32, %arg1: i32, %arg2: memref<2xi32, #tpu.memory_space<smem>>) -> (i32, i32, i32) {
    %c0_i32 = arith.constant 0 : i32
    %c0_i32_0 = arith.constant 0 : i32
    %c0_i32_1 = arith.constant 0 : i32
    return %arg1, %c0_i32, %c0_i32_0 : i32, i32, i32
  }
  func.func @transform_13(%arg0: i32, %arg1: i32, %arg2: memref<2xi32, #tpu.memory_space<smem>>) -> (i32, i32, i32) {
    %c0_i32 = arith.constant 0 : i32
    %c0_i32_0 = arith.constant 0 : i32
    %c0_i32_1 = arith.constant 0 : i32
    return %arg1, %c0_i32, %c0_i32_0 : i32, i32, i32
  }
  func.func @transform_14(%arg0: i32, %arg1: i32, %arg2: memref<2xi32, #tpu.memory_space<smem>>) -> (i32, i32, i32) {
    %c0_i32 = arith.constant 0 : i32
    %c0_i32_0 = arith.constant 0 : i32
    %c0_i32_1 = arith.constant 0 : i32
    return %arg1, %c0_i32, %c0_i32_0 : i32, i32, i32
  }
  func.func @transform_15(%arg0: i32, %arg1: i32, %arg2: memref<2xi32, #tpu.memory_space<smem>>) -> (i32, i32, i32) {
    %c0_i32 = arith.constant 0 : i32
    %c0_i32_0 = arith.constant 0 : i32
    %c0_i32_1 = arith.constant 0 : i32
    return %arg1, %c0_i32, %c0_i32_0 : i32, i32, i32
  }
  func.func @transform_16(%arg0: i32, %arg1: i32, %arg2: memref<2xi32, #tpu.memory_space<smem>>) -> (i32, i32, i32) {
    %c0_i32 = arith.constant 0 : i32
    %c0_i32_0 = arith.constant 0 : i32
    %c0_i32_1 = arith.constant 0 : i32
    return %arg1, %c0_i32, %c0_i32_0 : i32, i32, i32
  }
  func.func @transform_17(%arg0: i32, %arg1: i32, %arg2: memref<2xi32, #tpu.memory_space<smem>>) -> (i32, i32, i32) {
    %c0_i32 = arith.constant 0 : i32
    %c0_i32_0 = arith.constant 0 : i32
    %c0_i32_1 = arith.constant 0 : i32
    return %arg1, %c0_i32, %c0_i32_0 : i32, i32, i32
  }
  func.func @transform_18(%arg0: i32, %arg1: i32, %arg2: memref<2xi32, #tpu.memory_space<smem>>) -> (i32, i32) {
    %c0_i32 = arith.constant 0 : i32
    %c0_i32_0 = arith.constant 0 : i32
    %c0_i32_1 = arith.constant 0 : i32
    return %c0_i32, %c0_i32_0 : i32, i32
  }
  func.func @transform_19(%arg0: i32, %arg1: i32, %arg2: memref<2xi32, #tpu.memory_space<smem>>) -> (i32, i32) {
    %c0_i32 = arith.constant 0 : i32
    %c0_i32_0 = arith.constant 0 : i32
    %c0_i32_1 = arith.constant 0 : i32
    return %c0_i32, %c0_i32_0 : i32, i32
  }
  func.func @transform_20(%arg0: i32, %arg1: i32, %arg2: memref<2xi32, #tpu.memory_space<smem>>) -> (i32, i32, i32) {
    %c0_i32 = arith.constant 0 : i32
    %c0_i32_0 = arith.constant 0 : i32
    %c0_i32_1 = arith.constant 0 : i32
    return %arg0, %c0_i32, %c0_i32_0 : i32, i32, i32
  }
}

</mosaic_0001>

<llo_original>
// kernel: tpu_custom_call.1
$region0: #{tpu_custom_call.1}
  #allocation0 [shape = 'u32[]', space=smem, size = 0x4, offset = 0x4, fixed_abs, tag = 'smem constant byte address 0x4 - core index']
  #allocation1 [shape = 'u32[72,128]{1,0:T(1,128)}', space=vmem, size = 0x9000, scoped, tag = 'internal scratch']
  #allocation2 [shape = 'f32[8,32]{1,0:T(8,128)}', space=vmem, size = 0x1000, scoped, tag = 'scratch operand']
  #allocation3 [shape = 's32[1]{0}', space=sflag, size = 0x4, scoped, tag = 'scoped memory for tpu_custom_call.1']
  #allocation4 [shape = 'u8[512]{0}', space=smem, size = 0x200, scoped, tag = 'prefetched SMEM operand 0']
  %s0 = inlined_call_operand.hbm [shape: s32[2], index: 0, kind: input, shape index: {}]
  %s1 = inlined_call_operand.hbm [shape: f32[2,8,32], index: 1, kind: input, shape index: {}]
  %s2 = inlined_call_operand.hbm [shape: bf16[32,32], index: 2, kind: input, shape index: {}]
  %s3 = inlined_call_operand.vmem [shape: f32[1,32], index: 3, kind: input, shape index: {}]
  %s4 = inlined_call_operand.hbm [shape: f32[8,32], index: 4, kind: input, shape index: {}]
  %s5 = inlined_call_operand.hbm [shape: f32[1,32], index: 5, kind: input, shape index: {}]
  %s6 = inlined_call_operand.hbm [shape: f32[1,32], index: 6, kind: input, shape index: {}]
  %s7 = inlined_call_operand.vmem [shape: f32[2,1,32], index: 7, kind: input, shape index: {}]
  %s8 = inlined_call_operand.vmem [shape: f32[2,1,32], index: 8, kind: input, shape index: {}]
  %s9 = inlined_call_operand.vmem [shape: bf16[2,32,96], index: 9, kind: input, shape index: {}]
  %s10 = inlined_call_operand.vmem [shape: f32[2,1,96], index: 10, kind: input, shape index: {}]
  %s11 = inlined_call_operand.vmem [shape: bf16[2,32,32], index: 11, kind: input, shape index: {}]
  %s12 = inlined_call_operand.vmem [shape: f32[2,1,32], index: 12, kind: input, shape index: {}]
  %s13 = inlined_call_operand.vmem [shape: f32[2,1,32], index: 13, kind: input, shape index: {}]
  %s14 = inlined_call_operand.vmem [shape: f32[2,1,32], index: 14, kind: input, shape index: {}]
  %s15 = inlined_call_operand.vmem [shape: bf16[2,32,64], index: 15, kind: input, shape index: {}]
  %s16 = inlined_call_operand.vmem [shape: f32[2,1,64], index: 16, kind: input, shape index: {}]
  %s17 = inlined_call_operand.vmem [shape: bf16[2,64,32], index: 17, kind: input, shape index: {}]
  %s18 = inlined_call_operand.vmem [shape: f32[2,1,32], index: 18, kind: input, shape index: {}]
  %s19 = inlined_call_operand.hbm [shape: f32[1,32], index: 19, kind: input, shape index: {}]
  %s20 = inlined_call_operand.vmem [shape: f32[1,32], index: 20, kind: input, shape index: {}]
  %s21 = inlined_call_operand.hbm [shape: f32[2,8,32], index: 21, kind: output, shape index: {}]
  %s22 = sld [smem:[#allocation0]]
  $region145: #{tpu_custom_call.1} parent=0
    _
  %s24 = ssub.s32 1, %s22
  %s25 = scalar_select 0, %s24, %s22
  %s27 = sshll.u32 %s0, 4
  %s28 = int_to_ptr.hbm [resolvable:$true] %s27
  %30 = dma.hbm_to_smem %s28, 16, [#allocation4], [#allocation3]
  %32 = dma.done [#allocation3], 16
  %33 = sfence
  $region1: #{tpu_custom_call.1} parent=0
    #allocation5 [shape = 'u8[8192]{0}', space=vmem, size = 0x2000, scoped, tag = 'input window, operand 1']
    #allocation6 [shape = 's32[2]{0}', space=sflag, size = 0x8, scoped, tag = 'scoped memory for tpu_custom_call.1']
    #allocation7 [shape = 's32[2]{0}', space=sflag, size = 0x8, scoped, tag = 'scoped memory for tpu_custom_call.1']
    #allocation8 [shape = 'u8[8192]{0}', space=vmem, size = 0x2000, scoped, tag = 'input window, operand 2, single buffered']
    #allocation9 [shape = 's32[1]{0}', space=sflag, size = 0x4, scoped, tag = 'scoped memory for tpu_custom_call.1']
    #allocation10 [shape = 'u8[4096]{0}', space=vmem, size = 0x1000, scoped, tag = 'input window, operand 4, single buffered']
    #allocation11 [shape = 'u8[512]{0}', space=vmem, size = 0x400, scoped, tag = 'input window, operand 5, single buffered']
    #allocation12 [shape = 's32[1]{0}', space=sflag, size = 0x4, scoped, tag = 'scoped memory for tpu_custom_call.1']
    #allocation13 [shape = 'u8[512]{0}', space=vmem, size = 0x400, scoped, tag = 'input window, operand 6, single buffered']
    #allocation14 [shape = 'u8[512]{0}', space=vmem, size = 0x400, scoped, tag = 'input window, operand 19, single buffered']
    #allocation15 [shape = 's32[1]{0}', space=sflag, size = 0x4, scoped, tag = 'scoped memory for tpu_custom_call.1']
    #allocation16 [shape = 'u8[8192]{0}', space=vmem, size = 0x2000, scoped, tag = 'output window, operand 0']
    %34 = vsyncpa [#allocation6], 0
    %s35 = scalar_lea.sflag [#allocation6], 1
    %36 = vsyncpa %s35, 0
    %37 = vsyncpa [#allocation9], 0
    %38 = vsyncpa [#allocation12], 0
    %39 = vsyncpa [#allocation15], 0
    %40 = vsyncpa [#allocation7], 0
    %s41 = scalar_lea.sflag [#allocation7], 1
    %42 = vsyncpa %s41, 0
    loop: start=0, step=1, limit=6
    $region2: #{tpu_custom_call.1} parent=1 // loop_pre_header
      _
    $region3: #{tpu_custom_call.1} parent=1 // loop_header
      %s44 = sphi 0, %s48
      %p45 = scmp.ge.s32.totalorder %s44, 6
      %s51 = sphi 0, %s63
      %s52 = sphi 0, %s59
      %s53 = sphi 0, %s51
      %s54 = sphi 0, %s52
      %s55 = sphi 0, %s53
      %s56 = sphi 0, %s54
      %s66 = sphi 0, %s68
      %s69 = sphi 0, %s66
      %s70 = sphi 0, %s69
      %s86 = sphi 0, %s70
      %s90 = sphi 0, %s90
      %s92 = sphi 0, %s90
      %s93 = sphi 0, %s92
      %s107 = sphi 0, %s93
      %s111 = sphi 0, %s111
      %s113 = sphi 0, %s111
      %s114 = sphi 0, %s113
      %s128 = sphi 0, %s114
      %s132 = sphi 0, %s132
      %s134 = sphi 0, %s132
      %s135 = sphi 0, %s134
      %s149 = sphi 0, %s135
      %s153 = sphi 0, %s153
      %s155 = sphi 0, %s153
      %s156 = sphi 0, %s155
      %s170 = sphi 0, %s156
      %s174 = sphi 0, %s174
      %s176 = sphi 0, %s174
      %s177 = sphi 0, %s176
      %s191 = sphi 0, %s177
      %s197 = sphi 0, %s199
      %s200 = sphi 0, %s197
      %s201 = sphi 0, %s200
      %s217 = sphi 0, %s201
      %s223 = sphi 0, %s225
      %s226 = sphi 0, %s223
      %s227 = sphi 0, %s226
      %s243 = sphi 0, %s227
      %s249 = sphi 0, %s251
      %s252 = sphi 0, %s249
      %s253 = sphi 0, %s252
      %s269 = sphi 0, %s253
      %s275 = sphi 0, %s277
      %s278 = sphi 0, %s275
      %s279 = sphi 0, %s278
      %s295 = sphi 0, %s279
      %s301 = sphi 0, %s303
      %s304 = sphi 0, %s301
      %s305 = sphi 0, %s304
      %s321 = sphi 0, %s305
      %s327 = sphi 0, %s329
      %s330 = sphi 0, %s327
      %s331 = sphi 0, %s330
      %s347 = sphi 0, %s331
      %s353 = sphi 0, %s355
      %s356 = sphi 0, %s353
      %s357 = sphi 0, %s356
      %s373 = sphi 0, %s357
      %s379 = sphi 0, %s381
      %s382 = sphi 0, %s379
      %s383 = sphi 0, %s382
      %s399 = sphi 0, %s383
      %s405 = sphi 0, %s407
      %s408 = sphi 0, %s405
      %s409 = sphi 0, %s408
      %s425 = sphi 0, %s409
      %s431 = sphi 0, %s433
      %s434 = sphi 0, %s431
      %s435 = sphi 0, %s434
      %s451 = sphi 0, %s435
      %s457 = sphi 0, %s459
      %s460 = sphi 0, %s457
      %s461 = sphi 0, %s460
      %s477 = sphi 0, %s461
      %s483 = sphi 0, %s485
      %s486 = sphi 0, %s483
      %s487 = sphi 0, %s486
      %s503 = sphi 0, %s487
      %s507 = sphi 0, %s507
      %s509 = sphi 0, %s507
      %s510 = sphi 0, %s509
      %s524 = sphi 0, %s510
      %s528 = sphi 0, %s528
      %s530 = sphi 0, %s528
      %s531 = sphi 0, %s530
      %s545 = sphi 0, %s531
      %s551 = sphi 0, %s553
      %s554 = sphi 0, %s551
      %s555 = sphi 0, %s554
      %s571 = sphi 0, %s555
    $region4: #{tpu_custom_call.1} parent=1 // loop_header_branch
      %47 = sbr.rel (%p45) target = $region8
    $region5: #{tpu_custom_call.1} parent=1 // loop_body
      %s49 = ssub.s32 %s44, 1
      %s50 = ssub.s32 %s44, 2
      %s57 = sadd.s32 1, %s52
      %p58 = scmp.ge.s32.totalorder %s57, 2
      %s59 = scalar_select %p58, 0, %s57
      %s60 = sadd.s32 1, %s51
      %s61 = scalar_select %p58, %s60, %s51
      %p62 = scmp.ge.s32.totalorder %s61, 2
      %s63 = scalar_select %p62, 0, %s61
      %s64 = ssub.s32 %s51, %s63
      %p65 = scmp.eq.s32.totalorder %s64, 0
      %s67 = sadd.s32 %s66, 1
      %s68 = scalar_select %p65, %s66, %s67
      %p71 = pneg %p65
      %p72 = scmp.eq.s32.totalorder %s44, 3
      %p73 = por %p71, %p72
      %p74 = scmp.ne.s32.totalorder %s66, %s69
      %p75 = scmp.eq.s32.totalorder %s44, 0
      %p76 = por %p74, %p75
      %p77 = scmp.ne.s32.totalorder %s66, %s69
      %p78 = scmp.eq.s32.totalorder %s49, 3
      %p79 = por %p77, %p78
      %p80 = scmp.ne.s32.totalorder %s69, %s70
      %p81 = scmp.eq.s32.totalorder %s49, 0
      %p82 = por %p80, %p81
      %p83 = scmp.ne.s32.totalorder %s69, %s70
      %p84 = scmp.eq.s32.totalorder %s50, 3
      %p85 = por %p83, %p84
      %p87 = scmp.ne.s32.totalorder %s70, %s86
      %p88 = scmp.eq.s32.totalorder %s50, 0
      %p89 = por %p87, %p88
      %s91 = sadd.s32 %s90, 1
      %p94 = scmp.eq.s32.totalorder %s44, 3
      %p95 = scmp.ne.s32.totalorder %s90, %s92
      %p96 = scmp.eq.s32.totalorder %s44, 0
      %p97 = por %p95, %p96
      %p98 = scmp.ne.s32.totalorder %s90, %s92
      %p99 = scmp.eq.s32.totalorder %s49, 3
      %p100 = por %p98, %p99
      %p101 = scmp.ne.s32.totalorder %s92, %s93
      %p102 = scmp.eq.s32.totalorder %s49, 0
      %p103 = por %p101, %p102
      %p104 = scmp.ne.s32.totalorder %s92, %s93
      %p105 = scmp.eq.s32.totalorder %s50, 3
      %p106 = por %p104, %p105
      %p108 = scmp.ne.s32.totalorder %s93, %s107
      %p109 = scmp.eq.s32.totalorder %s50, 0
      %p110 = por %p108, %p109
      %s112 = sadd.s32 %s111, 1
      %p115 = scmp.eq.s32.totalorder %s44, 3
      %p116 = scmp.ne.s32.totalorder %s111, %s113
      %p117 = scmp.eq.s32.totalorder %s44, 0
      %p118 = por %p116, %p117
      %p119 = scmp.ne.s32.totalorder %s111, %s113
      %p120 = scmp.eq.s32.totalorder %s49, 3
      %p121 = por %p119, %p120
      %p122 = scmp.ne.s32.totalorder %s113, %s114
      %p123 = scmp.eq.s32.totalorder %s49, 0
      %p124 = por %p122, %p123
      %p125 = scmp.ne.s32.totalorder %s113, %s114
      %p126 = scmp.eq.s32.totalorder %s50, 3
      %p127 = por %p125, %p126
      %p129 = scmp.ne.s32.totalorder %s114, %s128
      %p130 = scmp.eq.s32.totalorder %s50, 0
      %p131 = por %p129, %p130
      %s133 = sadd.s32 %s132, 1
      %p136 = scmp.eq.s32.totalorder %s44, 3
      %p137 = scmp.ne.s32.totalorder %s132, %s134
      %p138 = scmp.eq.s32.totalorder %s44, 0
      %p139 = por %p137, %p138
      %p140 = scmp.ne.s32.totalorder %s132, %s134
      %p141 = scmp.eq.s32.totalorder %s49, 3
      %p142 = por %p140, %p141
      %p143 = scmp.ne.s32.totalorder %s134, %s135
      %p144 = scmp.eq.s32.totalorder %s49, 0
      %p145 = por %p143, %p144
      %p146 = scmp.ne.s32.totalorder %s134, %s135
      %p147 = scmp.eq.s32.totalorder %s50, 3
      %p148 = por %p146, %p147
      %p150 = scmp.ne.s32.totalorder %s135, %s149
      %p151 = scmp.eq.s32.totalorder %s50, 0
      %p152 = por %p150, %p151
      %s154 = sadd.s32 %s153, 1
      %p157 = scmp.eq.s32.totalorder %s44, 3
      %p158 = scmp.ne.s32.totalorder %s153, %s155
      %p159 = scmp.eq.s32.totalorder %s44, 0
      %p160 = por %p158, %p159
      %p161 = scmp.ne.s32.totalorder %s153, %s155
      %p162 = scmp.eq.s32.totalorder %s49, 3
      %p163 = por %p161, %p162
      %p164 = scmp.ne.s32.totalorder %s155, %s156
      %p165 = scmp.eq.s32.totalorder %s49, 0
      %p166 = por %p164, %p165
      %p167 = scmp.ne.s32.totalorder %s155, %s156
      %p168 = scmp.eq.s32.totalorder %s50, 3
      %p169 = por %p167, %p168
      %p171 = scmp.ne.s32.totalorder %s156, %s170
      %p172 = scmp.eq.s32.totalorder %s50, 0
      %p173 = por %p171, %p172
      %s175 = sadd.s32 %s174, 1
      %p178 = scmp.eq.s32.totalorder %s44, 3
      %p179 = scmp.ne.s32.totalorder %s174, %s176
      %p180 = scmp.eq.s32.totalorder %s44, 0
      %p181 = por %p179, %p180
      %p182 = scmp.ne.s32.totalorder %s174, %s176
      %p183 = scmp.eq.s32.totalorder %s49, 3
      %p184 = por %p182, %p183
      %p185 = scmp.ne.s32.totalorder %s176, %s177
      %p186 = scmp.eq.s32.totalorder %s49, 0
      %p187 = por %p185, %p186
      %p188 = scmp.ne.s32.totalorder %s176, %s177
      %p189 = scmp.eq.s32.totalorder %s50, 3
      %p190 = por %p188, %p189
      %p192 = scmp.ne.s32.totalorder %s177, %s191
      %p193 = scmp.eq.s32.totalorder %s50, 0
      %p194 = por %p192, %p193
      %s195 = ssub.s32 %s52, %s59
      %p196 = scmp.eq.s32.totalorder %s195, 0
      %s198 = sadd.s32 %s197, 1
      %s199 = scalar_select %p196, %s197, %s198
      %p202 = pneg %p196
      %p203 = scmp.eq.s32.totalorder %s44, 3
      %p204 = por %p202, %p203
      %p205 = scmp.ne.s32.totalorder %s197, %s200
      %p206 = scmp.eq.s32.totalorder %s44, 0
      %p207 = por %p205, %p206
      %p208 = scmp.ne.s32.totalorder %s197, %s200
      %p209 = scmp.eq.s32.totalorder %s49, 3
      %p210 = por %p208, %p209
      %p211 = scmp.ne.s32.totalorder %s200, %s201
      %p212 = scmp.eq.s32.totalorder %s49, 0
      %p213 = por %p211, %p212
      %p214 = scmp.ne.s32.totalorder %s200, %s201
      %p215 = scmp.eq.s32.totalorder %s50, 3
      %p216 = por %p214, %p215
      %p218 = scmp.ne.s32.totalorder %s201, %s217
      %p219 = scmp.eq.s32.totalorder %s50, 0
      %p220 = por %p218, %p219
      %s221 = ssub.s32 %s52, %s59
      %p222 = scmp.eq.s32.totalorder %s221, 0
      %s224 = sadd.s32 %s223, 1
      %s225 = scalar_select %p222, %s223, %s224
      %p228 = pneg %p222
      %p229 = scmp.eq.s32.totalorder %s44, 3
      %p230 = por %p228, %p229
      %p231 = scmp.ne.s32.totalorder %s223, %s226
      %p232 = scmp.eq.s32.totalorder %s44, 0
      %p233 = por %p231, %p232
      %p234 = scmp.ne.s32.totalorder %s223, %s226
      %p235 = scmp.eq.s32.totalorder %s49, 3
      %p236 = por %p234, %p235
      %p237 = scmp.ne.s32.totalorder %s226, %s227
      %p238 = scmp.eq.s32.totalorder %s49, 0
      %p239 = por %p237, %p238
      %p240 = scmp.ne.s32.totalorder %s226, %s227
      %p241 = scmp.eq.s32.totalorder %s50, 3
      %p242 = por %p240, %p241
      %p244 = scmp.ne.s32.totalorder %s227, %s243
      %p245 = scmp.eq.s32.totalorder %s50, 0
      %p246 = por %p244, %p245
      %s247 = ssub.s32 %s52, %s59
      %p248 = scmp.eq.s32.totalorder %s247, 0
      %s250 = sadd.s32 %s249, 1
      %s251 = scalar_select %p248, %s249, %s250
      %p254 = pneg %p248
      %p255 = scmp.eq.s32.totalorder %s44, 3
      %p256 = por %p254, %p255
      %p257 = scmp.ne.s32.totalorder %s249, %s252
      %p258 = scmp.eq.s32.totalorder %s44, 0
      %p259 = por %p257, %p258
      %p260 = scmp.ne.s32.totalorder %s249, %s252
      %p261 = scmp.eq.s32.totalorder %s49, 3
      %p262 = por %p260, %p261
      %p263 = scmp.ne.s32.totalorder %s252, %s253
      %p264 = scmp.eq.s32.totalorder %s49, 0
      %p265 = por %p263, %p264
      %p266 = scmp.ne.s32.totalorder %s252, %s253
      %p267 = scmp.eq.s32.totalorder %s50, 3
      %p268 = por %p266, %p267
      %p270 = scmp.ne.s32.totalorder %s253, %s269
      %p271 = scmp.eq.s32.totalorder %s50, 0
      %p272 = por %p270, %p271
      %s273 = ssub.s32 %s52, %s59
      %p274 = scmp.eq.s32.totalorder %s273, 0
      %s276 = sadd.s32 %s275, 1
      %s277 = scalar_select %p274, %s275, %s276
      %p280 = pneg %p274
      %p281 = scmp.eq.s32.totalorder %s44, 3
      %p282 = por %p280, %p281
      %p283 = scmp.ne.s32.totalorder %s275, %s278
      %p284 = scmp.eq.s32.totalorder %s44, 0
      %p285 = por %p283, %p284
      %p286 = scmp.ne.s32.totalorder %s275, %s278
      %p287 = scmp.eq.s32.totalorder %s49, 3
      %p288 = por %p286, %p287
      %p289 = scmp.ne.s32.totalorder %s278, %s279
      %p290 = scmp.eq.s32.totalorder %s49, 0
      %p291 = por %p289, %p290
      %p292 = scmp.ne.s32.totalorder %s278, %s279
      %p293 = scmp.eq.s32.totalorder %s50, 3
      %p294 = por %p292, %p293
      %p296 = scmp.ne.s32.totalorder %s279, %s295
      %p297 = scmp.eq.s32.totalorder %s50, 0
      %p298 = por %p296, %p297
      %s299 = ssub.s32 %s52, %s59
      %p300 = scmp.eq.s32.totalorder %s299, 0
      %s302 = sadd.s32 %s301, 1
      %s303 = scalar_select %p300, %s301, %s302
      %p306 = pneg %p300
      %p307 = scmp.eq.s32.totalorder %s44, 3
      %p308 = por %p306, %p307
      %p309 = scmp.ne.s32.totalorder %s301, %s304
      %p310 = scmp.eq.s32.totalorder %s44, 0
      %p311 = por %p309, %p310
      %p312 = scmp.ne.s32.totalorder %s301, %s304
      %p313 = scmp.eq.s32.totalorder %s49, 3
      %p314 = por %p312, %p313
      %p315 = scmp.ne.s32.totalorder %s304, %s305
      %p316 = scmp.eq.s32.totalorder %s49, 0
      %p317 = por %p315, %p316
      %p318 = scmp.ne.s32.totalorder %s304, %s305
      %p319 = scmp.eq.s32.totalorder %s50, 3
      %p320 = por %p318, %p319
      %p322 = scmp.ne.s32.totalorder %s305, %s321
      %p323 = scmp.eq.s32.totalorder %s50, 0
      %p324 = por %p322, %p323
      %s325 = ssub.s32 %s52, %s59
      %p326 = scmp.eq.s32.totalorder %s325, 0
      %s328 = sadd.s32 %s327, 1
      %s329 = scalar_select %p326, %s327, %s328
      %p332 = pneg %p326
      %p333 = scmp.eq.s32.totalorder %s44, 3
      %p334 = por %p332, %p333
      %p335 = scmp.ne.s32.totalorder %s327, %s330
      %p336 = scmp.eq.s32.totalorder %s44, 0
      %p337 = por %p335, %p336
      %p338 = scmp.ne.s32.totalorder %s327, %s330
      %p339 = scmp.eq.s32.totalorder %s49, 3
      %p340 = por %p338, %p339
      %p341 = scmp.ne.s32.totalorder %s330, %s331
      %p342 = scmp.eq.s32.totalorder %s49, 0
      %p343 = por %p341, %p342
      %p344 = scmp.ne.s32.totalorder %s330, %s331
      %p345 = scmp.eq.s32.totalorder %s50, 3
      %p346 = por %p344, %p345
      %p348 = scmp.ne.s32.totalorder %s331, %s347
      %p349 = scmp.eq.s32.totalorder %s50, 0
      %p350 = por %p348, %p349
      %s351 = ssub.s32 %s52, %s59
      %p352 = scmp.eq.s32.totalorder %s351, 0
      %s354 = sadd.s32 %s353, 1
      %s355 = scalar_select %p352, %s353, %s354
      %p358 = pneg %p352
      %p359 = scmp.eq.s32.totalorder %s44, 3
      %p360 = por %p358, %p359
      %p361 = scmp.ne.s32.totalorder %s353, %s356
      %p362 = scmp.eq.s32.totalorder %s44, 0
      %p363 = por %p361, %p362
      %p364 = scmp.ne.s32.totalorder %s353, %s356
      %p365 = scmp.eq.s32.totalorder %s49, 3
      %p366 = por %p364, %p365
      %p367 = scmp.ne.s32.totalorder %s356, %s357
      %p368 = scmp.eq.s32.totalorder %s49, 0
      %p369 = por %p367, %p368
      %p370 = scmp.ne.s32.totalorder %s356, %s357
      %p371 = scmp.eq.s32.totalorder %s50, 3
      %p372 = por %p370, %p371
      %p374 = scmp.ne.s32.totalorder %s357, %s373
      %p375 = scmp.eq.s32.totalorder %s50, 0
      %p376 = por %p374, %p375
      %s377 = ssub.s32 %s52, %s59
      %p378 = scmp.eq.s32.totalorder %s377, 0
      %s380 = sadd.s32 %s379, 1
      %s381 = scalar_select %p378, %s379, %s380
      %p384 = pneg %p378
      %p385 = scmp.eq.s32.totalorder %s44, 3
      %p386 = por %p384, %p385
      %p387 = scmp.ne.s32.totalorder %s379, %s382
      %p388 = scmp.eq.s32.totalorder %s44, 0
      %p389 = por %p387, %p388
      %p390 = scmp.ne.s32.totalorder %s379, %s382
      %p391 = scmp.eq.s32.totalorder %s49, 3
      %p392 = por %p390, %p391
      %p393 = scmp.ne.s32.totalorder %s382, %s383
      %p394 = scmp.eq.s32.totalorder %s49, 0
      %p395 = por %p393, %p394
      %p396 = scmp.ne.s32.totalorder %s382, %s383
      %p397 = scmp.eq.s32.totalorder %s50, 3
      %p398 = por %p396, %p397
      %p400 = scmp.ne.s32.totalorder %s383, %s399
      %p401 = scmp.eq.s32.totalorder %s50, 0
      %p402 = por %p400, %p401
      %s403 = ssub.s32 %s52, %s59
      %p404 = scmp.eq.s32.totalorder %s403, 0
      %s406 = sadd.s32 %s405, 1
      %s407 = scalar_select %p404, %s405, %s406
      %p410 = pneg %p404
      %p411 = scmp.eq.s32.totalorder %s44, 3
      %p412 = por %p410, %p411
      %p413 = scmp.ne.s32.totalorder %s405, %s408
      %p414 = scmp.eq.s32.totalorder %s44, 0
      %p415 = por %p413, %p414
      %p416 = scmp.ne.s32.totalorder %s405, %s408
      %p417 = scmp.eq.s32.totalorder %s49, 3
      %p418 = por %p416, %p417
      %p419 = scmp.ne.s32.totalorder %s408, %s409
      %p420 = scmp.eq.s32.totalorder %s49, 0
      %p421 = por %p419, %p420
      %p422 = scmp.ne.s32.totalorder %s408, %s409
      %p423 = scmp.eq.s32.totalorder %s50, 3
      %p424 = por %p422, %p423
      %p426 = scmp.ne.s32.totalorder %s409, %s425
      %p427 = scmp.eq.s32.totalorder %s50, 0
      %p428 = por %p426, %p427
      %s429 = ssub.s32 %s52, %s59
      %p430 = scmp.eq.s32.totalorder %s429, 0
      %s432 = sadd.s32 %s431, 1
      %s433 = scalar_select %p430, %s431, %s432
      %p436 = pneg %p430
      %p437 = scmp.eq.s32.totalorder %s44, 3
      %p438 = por %p436, %p437
      %p439 = scmp.ne.s32.totalorder %s431, %s434
      %p440 = scmp.eq.s32.totalorder %s44, 0
      %p441 = por %p439, %p440
      %p442 = scmp.ne.s32.totalorder %s431, %s434
      %p443 = scmp.eq.s32.totalorder %s49, 3
      %p444 = por %p442, %p443
      %p445 = scmp.ne.s32.totalorder %s434, %s435
      %p446 = scmp.eq.s32.totalorder %s49, 0
      %p447 = por %p445, %p446
      %p448 = scmp.ne.s32.totalorder %s434, %s435
      %p449 = scmp.eq.s32.totalorder %s50, 3
      %p450 = por %p448, %p449
      %p452 = scmp.ne.s32.totalorder %s435, %s451
      %p453 = scmp.eq.s32.totalorder %s50, 0
      %p454 = por %p452, %p453
      %s455 = ssub.s32 %s52, %s59
      %p456 = scmp.eq.s32.totalorder %s455, 0
      %s458 = sadd.s32 %s457, 1
      %s459 = scalar_select %p456, %s457, %s458
      %p462 = pneg %p456
      %p463 = scmp.eq.s32.totalorder %s44, 3
      %p464 = por %p462, %p463
      %p465 = scmp.ne.s32.totalorder %s457, %s460
      %p466 = scmp.eq.s32.totalorder %s44, 0
      %p467 = por %p465, %p466
      %p468 = scmp.ne.s32.totalorder %s457, %s460
      %p469 = scmp.eq.s32.totalorder %s49, 3
      %p470 = por %p468, %p469
      %p471 = scmp.ne.s32.totalorder %s460, %s461
      %p472 = scmp.eq.s32.totalorder %s49, 0
      %p473 = por %p471, %p472
      %p474 = scmp.ne.s32.totalorder %s460, %s461
      %p475 = scmp.eq.s32.totalorder %s50, 3
      %p476 = por %p474, %p475
      %p478 = scmp.ne.s32.totalorder %s461, %s477
      %p479 = scmp.eq.s32.totalorder %s50, 0
      %p480 = por %p478, %p479
      %s481 = ssub.s32 %s52, %s59
      %p482 = scmp.eq.s32.totalorder %s481, 0
      %s484 = sadd.s32 %s483, 1
      %s485 = scalar_select %p482, %s483, %s484
      %p488 = pneg %p482
      %p489 = scmp.eq.s32.totalorder %s44, 3
      %p490 = por %p488, %p489
      %p491 = scmp.ne.s32.totalorder %s483, %s486
      %p492 = scmp.eq.s32.totalorder %s44, 0
      %p493 = por %p491, %p492
      %p494 = scmp.ne.s32.totalorder %s483, %s486
      %p495 = scmp.eq.s32.totalorder %s49, 3
      %p496 = por %p494, %p495
      %p497 = scmp.ne.s32.totalorder %s486, %s487
      %p498 = scmp.eq.s32.totalorder %s49, 0
      %p499 = por %p497, %p498
      %p500 = scmp.ne.s32.totalorder %s486, %s487
      %p501 = scmp.eq.s32.totalorder %s50, 3
      %p502 = por %p500, %p501
      %p504 = scmp.ne.s32.totalorder %s487, %s503
      %p505 = scmp.eq.s32.totalorder %s50, 0
      %p506 = por %p504, %p505
      %s508 = sadd.s32 %s507, 1
      %p511 = scmp.eq.s32.totalorder %s44, 3
      %p512 = scmp.ne.s32.totalorder %s507, %s509
      %p513 = scmp.eq.s32.totalorder %s44, 0
      %p514 = por %p512, %p513
      %p515 = scmp.ne.s32.totalorder %s507, %s509
      %p516 = scmp.eq.s32.totalorder %s49, 3
      %p517 = por %p515, %p516
      %p518 = scmp.ne.s32.totalorder %s509, %s510
      %p519 = scmp.eq.s32.totalorder %s49, 0
      %p520 = por %p518, %p519
      %p521 = scmp.ne.s32.totalorder %s509, %s510
      %p522 = scmp.eq.s32.totalorder %s50, 3
      %p523 = por %p521, %p522
      %p525 = scmp.ne.s32.totalorder %s510, %s524
      %p526 = scmp.eq.s32.totalorder %s50, 0
      %p527 = por %p525, %p526
      %s529 = sadd.s32 %s528, 1
      %p532 = scmp.eq.s32.totalorder %s44, 3
      %p533 = scmp.ne.s32.totalorder %s528, %s530
      %p534 = scmp.eq.s32.totalorder %s44, 0
      %p535 = por %p533, %p534
      %p536 = scmp.ne.s32.totalorder %s528, %s530
      %p537 = scmp.eq.s32.totalorder %s49, 3
      %p538 = por %p536, %p537
      %p539 = scmp.ne.s32.totalorder %s530, %s531
      %p540 = scmp.eq.s32.totalorder %s49, 0
      %p541 = por %p539, %p540
      %p542 = scmp.ne.s32.totalorder %s530, %s531
      %p543 = scmp.eq.s32.totalorder %s50, 3
      %p544 = por %p542, %p543
      %p546 = scmp.ne.s32.totalorder %s531, %s545
      %p547 = scmp.eq.s32.totalorder %s50, 0
      %p548 = por %p546, %p547
      %s549 = ssub.s32 %s51, %s63
      %p550 = scmp.eq.s32.totalorder %s549, 0
      %s552 = sadd.s32 %s551, 1
      %s553 = scalar_select %p550, %s551, %s552
      %p556 = pneg %p550
      %p557 = scmp.eq.s32.totalorder %s44, 3
      %p558 = por %p556, %p557
      %p559 = scmp.ne.s32.totalorder %s551, %s554
      %p560 = scmp.eq.s32.totalorder %s44, 0
      %p561 = por %p559, %p560
      %p562 = scmp.ne.s32.totalorder %s551, %s554
      %p563 = scmp.eq.s32.totalorder %s49, 3
      %p564 = por %p562, %p563
      %p565 = scmp.ne.s32.totalorder %s554, %s555
      %p566 = scmp.eq.s32.totalorder %s49, 0
      %p567 = por %p565, %p566
      %p568 = scmp.ne.s32.totalorder %s554, %s555
      %p569 = scmp.eq.s32.totalorder %s50, 3
      %p570 = por %p568, %p569
      %p572 = scmp.ne.s32.totalorder %s555, %s571
      %p573 = scmp.eq.s32.totalorder %s50, 0
      %p574 = por %p572, %p573
      %p575 = scmp.le.s32.totalorder 1, %s44
      %p576 = scmp.lt.s32.totalorder %s44, 5
      %p577 = pnand %p575, %p576
      %p578 = pneg %p577
      // Predicated region
      $region9: #{tpu_custom_call.1} parent=5 // pred_check
        _
      $region10: #{tpu_custom_call.1} parent=5 // pred_check_branch
        %580 = sbr.rel (%p577) target = $region12
      $region11: #{tpu_custom_call.1} parent=5 // pred_region
        %s581 = ssub.s32 %s44, 1
        // Predicated region
        $region13: #{tpu_custom_call.1} parent=11 // pred_check
          %p582 = pneg %p103
        $region14: #{tpu_custom_call.1} parent=11 // pred_check_branch
          %584 = sbr.rel (%p582) target = $region16
        $region15: #{tpu_custom_call.1} parent=11 // pred_region
          %586 = vsyncadd [#allocation9], 0
          %s587 = sshll.u32 %s2, 4
          %s588 = int_to_ptr.hbm [resolvable:$true] %s587
          %s589 = sshll.u32 [#allocation8], 4
          %s590 = int_to_ptr.vmem [resolvable:$true] %s589
          %595 = dma.hbm_to_vmem [thread:$0]  %s588, 256, %s590, [#allocation9], 64, 64, 4
        $region16: #{tpu_custom_call.1} parent=11 // pred_fallthru
          _
        // Predicated region
        $region17: #{tpu_custom_call.1} parent=11 // pred_check
          %p596 = pneg %p124
        $region18: #{tpu_custom_call.1} parent=11 // pred_check_branch
          %598 = sbr.rel (%p596) target = $region20
        $region19: #{tpu_custom_call.1} parent=11 // pred_region
          _
        $region20: #{tpu_custom_call.1} parent=11 // pred_fallthru
          _
        // Predicated region
        $region21: #{tpu_custom_call.1} parent=11 // pred_check
          %p599 = pneg %p145
        $region22: #{tpu_custom_call.1} parent=11 // pred_check_branch
          %601 = sbr.rel (%p599) target = $region24
        $region23: #{tpu_custom_call.1} parent=11 // pred_region
          %603 = vsyncadd [#allocation9], 0
          %s605 = sshll.u32 %s4, 4
          %s606 = int_to_ptr.hbm [resolvable:$true] %s605
          %s607 = sshll.u32 [#allocation10], 4
          %s608 = int_to_ptr.vmem [resolvable:$true] %s607
          %610 = dma.hbm_to_vmem [thread:$0]  %s606, 128, %s608, [#allocation9]
        $region24: #{tpu_custom_call.1} parent=11 // pred_fallthru
          _
        // Predicated region
        $region25: #{tpu_custom_call.1} parent=11 // pred_check
          %p611 = pneg %p166
        $region26: #{tpu_custom_call.1} parent=11 // pred_check_branch
          %613 = sbr.rel (%p611) target = $region28
        $region27: #{tpu_custom_call.1} parent=11 // pred_region
          %615 = vsyncadd [#allocation12], 0
          %s617 = sshll.u32 %s5, 4
          %s618 = int_to_ptr.hbm [resolvable:$true] %s617
          %s619 = sshll.u32 [#allocation11], 4
          %s620 = int_to_ptr.vmem [resolvable:$true] %s619
          %622 = dma.hbm_to_vmem [thread:$0]  %s618, 16, %s620, [#allocation12]
        $region28: #{tpu_custom_call.1} parent=11 // pred_fallthru
          _
        // Predicated region
        $region29: #{tpu_custom_call.1} parent=11 // pred_check
          %p623 = pneg %p187
        $region30: #{tpu_custom_call.1} parent=11 // pred_check_branch
          %625 = sbr.rel (%p623) target = $region32
        $region31: #{tpu_custom_call.1} parent=11 // pred_region
          %627 = vsyncadd [#allocation12], 0
          %s629 = sshll.u32 %s6, 4
          %s630 = int_to_ptr.hbm [resolvable:$true] %s629
          %s631 = sshll.u32 [#allocation13], 4
          %s632 = int_to_ptr.vmem [resolvable:$true] %s631
          %634 = dma.hbm_to_vmem [thread:$0]  %s630, 16, %s632, [#allocation12]
        $region32: #{tpu_custom_call.1} parent=11 // pred_fallthru
          _
        // Predicated region
        $region33: #{tpu_custom_call.1} parent=11 // pred_check
          %p635 = pneg %p520
        $region34: #{tpu_custom_call.1} parent=11 // pred_check_branch
          %637 = sbr.rel (%p635) target = $region36
        $region35: #{tpu_custom_call.1} parent=11 // pred_region
          %639 = vsyncadd [#allocation15], 0
          %s641 = sshll.u32 %s19, 4
          %s642 = int_to_ptr.hbm [resolvable:$true] %s641
          %s643 = sshll.u32 [#allocation14], 4
          %s644 = int_to_ptr.vmem [resolvable:$true] %s643
          %646 = dma.hbm_to_vmem [thread:$0]  %s642, 16, %s644, [#allocation15]
        $region36: #{tpu_custom_call.1} parent=11 // pred_fallthru
          _
        // Predicated region
        $region37: #{tpu_custom_call.1} parent=11 // pred_check
          %p647 = pneg %p541
        $region38: #{tpu_custom_call.1} parent=11 // pred_check_branch
          %649 = sbr.rel (%p647) target = $region40
        $region39: #{tpu_custom_call.1} parent=11 // pred_region
          _
        $region40: #{tpu_custom_call.1} parent=11 // pred_fallthru
          _
      $region12: #{tpu_custom_call.1} parent=5 // pred_fallthru
        _
      %p650 = scmp.lt.s32.totalorder %s44, 4
      // Predicated region
      $region41: #{tpu_custom_call.1} parent=5 // pred_check
        %p651 = pneg %p650
      $region42: #{tpu_custom_call.1} parent=5 // pred_check_branch
        %653 = sbr.rel (%p651) target = $region44
      $region43: #{tpu_custom_call.1} parent=5 // pred_region
        // Predicated region
        $region45: #{tpu_custom_call.1} parent=43 // pred_check
          %p654 = pneg %p76
        $region46: #{tpu_custom_call.1} parent=43 // pred_check_branch
          %656 = sbr.rel (%p654) target = $region48
        $region47: #{tpu_custom_call.1} parent=43 // pred_region
          %s657 = sand.u32 %s66, 1
          %s658 = scalar_lea.sflag [#allocation6], %s657
          %s659 = sand.u32 %s66, 1
          %s660 = smul.addr %s659, 8
          %s661 = scalar_lea.vmem [#allocation5], %s660
          %663 = vsyncadd %s658, 0
          %s664 = smul.addr %s51, 8
          %s665 = scalar_lea.hbm %s1, %s664
          %s667 = sshll.u32 %s665, 4
          %s668 = int_to_ptr.hbm [resolvable:$true] %s667
          %s669 = sshll.u32 %s661, 4
          %s670 = int_to_ptr.vmem [resolvable:$true] %s669
          %672 = dma.hbm_to_vmem [thread:$0]  %s668, 128, %s670, %s658
        $region48: #{tpu_custom_call.1} parent=43 // pred_fallthru
          _
        // Predicated region
        $region49: #{tpu_custom_call.1} parent=43 // pred_check
          %p673 = pneg %p207
        $region50: #{tpu_custom_call.1} parent=43 // pred_check_branch
          %675 = sbr.rel (%p673) target = $region52
        $region51: #{tpu_custom_call.1} parent=43 // pred_region
          %p676 = scmp.lt.s32.totalorder %s52, 1
          %s677 = scalar_select %p676, %s52, 1
          %s678 = scalar_lea.vmem %s7, %s677
        $region52: #{tpu_custom_call.1} parent=43 // pred_fallthru
          _
        // Predicated region
        $region53: #{tpu_custom_call.1} parent=43 // pred_check
          %p679 = pneg %p233
        $region54: #{tpu_custom_call.1} parent=43 // pred_check_branch
          %681 = sbr.rel (%p679) target = $region56
        $region55: #{tpu_custom_call.1} parent=43 // pred_region
          %p682 = scmp.lt.s32.totalorder %s52, 1
          %s683 = scalar_select %p682, %s52, 1
          %s684 = scalar_lea.vmem %s8, %s683
        $region56: #{tpu_custom_call.1} parent=43 // pred_fallthru
          _
        // Predicated region
        $region57: #{tpu_custom_call.1} parent=43 // pred_check
          %p685 = pneg %p259
        $region58: #{tpu_custom_call.1} parent=43 // pred_check_branch
          %687 = sbr.rel (%p685) target = $region60
        $region59: #{tpu_custom_call.1} parent=43 // pred_region
          %p688 = scmp.lt.s32.totalorder %s52, 1
          %s689 = scalar_select %p688, %s52, 1
          %s690 = smul.addr %s689, 4
          %s691 = smul.addr %s690, 4
          %s692 = scalar_lea.vmem %s9, %s691
        $region60: #{tpu_custom_call.1} parent=43 // pred_fallthru
          _
        // Predicated region
        $region61: #{tpu_custom_call.1} parent=43 // pred_check
          %p693 = pneg %p285
        $region62: #{tpu_custom_call.1} parent=43 // pred_check_branch
          %695 = sbr.rel (%p693) target = $region64
        $region63: #{tpu_custom_call.1} parent=43 // pred_region
          %p696 = scmp.lt.s32.totalorder %s52, 1
          %s697 = scalar_select %p696, %s52, 1
          %s698 = scalar_lea.vmem %s10, %s697
        $region64: #{tpu_custom_call.1} parent=43 // pred_fallthru
          _
        // Predicated region
        $region65: #{tpu_custom_call.1} parent=43 // pred_check
          %p699 = pneg %p311
        $region66: #{tpu_custom_call.1} parent=43 // pred_check_branch
          %701 = sbr.rel (%p699) target = $region68
        $region67: #{tpu_custom_call.1} parent=43 // pred_region
          %p702 = scmp.lt.s32.totalorder %s52, 1
          %s703 = scalar_select %p702, %s52, 1
          %s704 = smul.addr %s703, 4
          %s705 = smul.addr %s704, 4
          %s706 = scalar_lea.vmem %s11, %s705
        $region68: #{tpu_custom_call.1} parent=43 // pred_fallthru
          _
        // Predicated region
        $region69: #{tpu_custom_call.1} parent=43 // pred_check
          %p707 = pneg %p337
        $region70: #{tpu_custom_call.1} parent=43 // pred_check_branch
          %709 = sbr.rel (%p707) target = $region72
        $region71: #{tpu_custom_call.1} parent=43 // pred_region
          %p710 = scmp.lt.s32.totalorder %s52, 1
          %s711 = scalar_select %p710, %s52, 1
          %s712 = scalar_lea.vmem %s12, %s711
        $region72: #{tpu_custom_call.1} parent=43 // pred_fallthru
          _
        // Predicated region
        $region73: #{tpu_custom_call.1} parent=43 // pred_check
          %p713 = pneg %p363
        $region74: #{tpu_custom_call.1} parent=43 // pred_check_branch
          %715 = sbr.rel (%p713) target = $region76
        $region75: #{tpu_custom_call.1} parent=43 // pred_region
          %p716 = scmp.lt.s32.totalorder %s52, 1
          %s717 = scalar_select %p716, %s52, 1
          %s718 = scalar_lea.vmem %s13, %s717
        $region76: #{tpu_custom_call.1} parent=43 // pred_fallthru
          _
        // Predicated region
        $region77: #{tpu_custom_call.1} parent=43 // pred_check
          %p719 = pneg %p389
        $region78: #{tpu_custom_call.1} parent=43 // pred_check_branch
          %721 = sbr.rel (%p719) target = $region80
        $region79: #{tpu_custom_call.1} parent=43 // pred_region
          %p722 = scmp.lt.s32.totalorder %s52, 1
          %s723 = scalar_select %p722, %s52, 1
          %s724 = scalar_lea.vmem %s14, %s723
        $region80: #{tpu_custom_call.1} parent=43 // pred_fallthru
          _
        // Predicated region
        $region81: #{tpu_custom_call.1} parent=43 // pred_check
          %p725 = pneg %p415
        $region82: #{tpu_custom_call.1} parent=43 // pred_check_branch
          %727 = sbr.rel (%p725) target = $region84
        $region83: #{tpu_custom_call.1} parent=43 // pred_region
          %p728 = scmp.lt.s32.totalorder %s52, 1
          %s729 = scalar_select %p728, %s52, 1
          %s730 = smul.addr %s729, 4
          %s731 = smul.addr %s730, 4
          %s732 = scalar_lea.vmem %s15, %s731
        $region84: #{tpu_custom_call.1} parent=43 // pred_fallthru
          _
        // Predicated region
        $region85: #{tpu_custom_call.1} parent=43 // pred_check
          %p733 = pneg %p441
        $region86: #{tpu_custom_call.1} parent=43 // pred_check_branch
          %735 = sbr.rel (%p733) target = $region88
        $region87: #{tpu_custom_call.1} parent=43 // pred_region
          %p736 = scmp.lt.s32.totalorder %s52, 1
          %s737 = scalar_select %p736, %s52, 1
          %s738 = scalar_lea.vmem %s16, %s737
        $region88: #{tpu_custom_call.1} parent=43 // pred_fallthru
          _
        // Predicated region
        $region89: #{tpu_custom_call.1} parent=43 // pred_check
          %p739 = pneg %p467
        $region90: #{tpu_custom_call.1} parent=43 // pred_check_branch
          %741 = sbr.rel (%p739) target = $region92
        $region91: #{tpu_custom_call.1} parent=43 // pred_region
          %p742 = scmp.lt.s32.totalorder %s52, 1
          %s743 = scalar_select %p742, %s52, 1
          %s744 = smul.addr %s743, 8
          %s745 = smul.addr %s744, 4
          %s746 = scalar_lea.vmem %s17, %s745
        $region92: #{tpu_custom_call.1} parent=43 // pred_fallthru
          _
        // Predicated region
        $region93: #{tpu_custom_call.1} parent=43 // pred_check
          %p747 = pneg %p493
        $region94: #{tpu_custom_call.1} parent=43 // pred_check_branch
          %749 = sbr.rel (%p747) target = $region96
        $region95: #{tpu_custom_call.1} parent=43 // pred_region
          %p750 = scmp.lt.s32.totalorder %s52, 1
          %s751 = scalar_select %p750, %s52, 1
          %s752 = scalar_lea.vmem %s18, %s751
        $region96: #{tpu_custom_call.1} parent=43 // pred_fallthru
          _
      $region44: #{tpu_custom_call.1} parent=5 // pred_fallthru
        _
      %p753 = scmp.le.s32.totalorder 1, %s44
      %p754 = scmp.lt.s32.totalorder %s44, 5
      %p755 = pnand %p753, %p754
      %p756 = pneg %p755
      // Predicated region
      $region97: #{tpu_custom_call.1} parent=5 // pred_check
        _
      $region98: #{tpu_custom_call.1} parent=5 // pred_check_branch
        %758 = sbr.rel (%p755) target = $region100
      $region99: #{tpu_custom_call.1} parent=5 // pred_region
        %s759 = ssub.s32 %s44, 1
        %s760 = sand.u32 %s69, 1
        %s761 = scalar_lea.sflag [#allocation6], %s760
        %s762 = sand.u32 %s69, 1
        %s763 = smul.addr %s762, 8
        %s764 = scalar_lea.vmem [#allocation5], %s763
        // Predicated region
        $region101: #{tpu_custom_call.1} parent=99 // pred_check
          %p765 = pneg %p82
        $region102: #{tpu_custom_call.1} parent=99 // pred_check_branch
          %767 = sbr.rel (%p765) target = $region104
        $region103: #{tpu_custom_call.1} parent=99 // pred_region
          %769 = dma.done %s761, 128
        $region104: #{tpu_custom_call.1} parent=99 // pred_fallthru
          _
        // Predicated region
        $region105: #{tpu_custom_call.1} parent=99 // pred_check
          %p770 = pneg %p103
        $region106: #{tpu_custom_call.1} parent=99 // pred_check_branch
          %772 = sbr.rel (%p770) target = $region108
        $region107: #{tpu_custom_call.1} parent=99 // pred_region
          %774 = dma.done [#allocation9], 256
        $region108: #{tpu_custom_call.1} parent=99 // pred_fallthru
          _
        // Predicated region
        $region109: #{tpu_custom_call.1} parent=99 // pred_check
          %p775 = pneg %p145
        $region110: #{tpu_custom_call.1} parent=99 // pred_check_branch
          %777 = sbr.rel (%p775) target = $region112
        $region111: #{tpu_custom_call.1} parent=99 // pred_region
          %779 = dma.done [#allocation9], 128
        $region112: #{tpu_custom_call.1} parent=99 // pred_fallthru
          _
        // Predicated region
        $region113: #{tpu_custom_call.1} parent=99 // pred_check
          %p780 = pneg %p166
        $region114: #{tpu_custom_call.1} parent=99 // pred_check_branch
          %782 = sbr.rel (%p780) target = $region116
        $region115: #{tpu_custom_call.1} parent=99 // pred_region
          %784 = dma.done [#allocation12], 16
        $region116: #{tpu_custom_call.1} parent=99 // pred_fallthru
          _
        // Predicated region
        $region117: #{tpu_custom_call.1} parent=99 // pred_check
          %p785 = pneg %p187
        $region118: #{tpu_custom_call.1} parent=99 // pred_check_branch
          %787 = sbr.rel (%p785) target = $region120
        $region119: #{tpu_custom_call.1} parent=99 // pred_region
          %789 = dma.done [#allocation12], 16
        $region120: #{tpu_custom_call.1} parent=99 // pred_fallthru
          _
        // Predicated region
        $region121: #{tpu_custom_call.1} parent=99 // pred_check
          %p790 = pneg %p520
        $region122: #{tpu_custom_call.1} parent=99 // pred_check_branch
          %792 = sbr.rel (%p790) target = $region124
        $region123: #{tpu_custom_call.1} parent=99 // pred_region
          %794 = dma.done [#allocation15], 16
        $region124: #{tpu_custom_call.1} parent=99 // pred_fallthru
          _
        %s795 = sand.u32 %s69, 1
        %s796 = scalar_lea.sflag [#allocation6], %s795
        %s797 = sand.u32 %s69, 1
        %s798 = smul.addr %s797, 8
        %s799 = scalar_lea.vmem [#allocation5], %s798
        %p800 = pneg %p82
        %p801 = pneg %p79
        %p802 = pneg %p103
        %p803 = pneg %p100
        %p804 = pneg %p124
        %p805 = pneg %p121
        %p806 = pneg %p145
        %p807 = pneg %p142
        %p808 = pneg %p166
        %p809 = pneg %p163
        %p810 = pneg %p187
        %p811 = pneg %p184
        %p812 = scmp.lt.s32.totalorder %s54, 1
        %s813 = scalar_select %p812, %s54, 1
        %s814 = scalar_lea.vmem %s7, %s813
        %p815 = pneg %p213
        %p816 = pneg %p210
        %p817 = scmp.lt.s32.totalorder %s54, 1
        %s818 = scalar_select %p817, %s54, 1
        %s819 = scalar_lea.vmem %s8, %s818
        %p820 = pneg %p239
        %p821 = pneg %p236
        %p822 = scmp.lt.s32.totalorder %s54, 1
        %s823 = scalar_select %p822, %s54, 1
        %s824 = smul.addr %s823, 4
        %s825 = smul.addr %s824, 4
        %s826 = scalar_lea.vmem %s9, %s825
        %p827 = pneg %p265
        %p828 = pneg %p262
        %p829 = scmp.lt.s32.totalorder %s54, 1
        %s830 = scalar_select %p829, %s54, 1
        %s831 = scalar_lea.vmem %s10, %s830
        %p832 = pneg %p291
        %p833 = pneg %p288
        %p834 = scmp.lt.s32.totalorder %s54, 1
        %s835 = scalar_select %p834, %s54, 1
        %s836 = smul.addr %s835, 4
        %s837 = smul.addr %s836, 4
        %s838 = scalar_lea.vmem %s11, %s837
        %p839 = pneg %p317
        %p840 = pneg %p314
        %p841 = scmp.lt.s32.totalorder %s54, 1
        %s842 = scalar_select %p841, %s54, 1
        %s843 = scalar_lea.vmem %s12, %s842
        %p844 = pneg %p343
        %p845 = pneg %p340
        %p846 = scmp.lt.s32.totalorder %s54, 1
        %s847 = scalar_select %p846, %s54, 1
        %s848 = scalar_lea.vmem %s13, %s847
        %p849 = pneg %p369
        %p850 = pneg %p366
        %p851 = scmp.lt.s32.totalorder %s54, 1
        %s852 = scalar_select %p851, %s54, 1
        %s853 = scalar_lea.vmem %s14, %s852
        %p854 = pneg %p395
        %p855 = pneg %p392
        %p856 = scmp.lt.s32.totalorder %s54, 1
        %s857 = scalar_select %p856, %s54, 1
        %s858 = smul.addr %s857, 4
        %s859 = smul.addr %s858, 4
        %s860 = scalar_lea.vmem %s15, %s859
        %p861 = pneg %p421
        %p862 = pneg %p418
        %p863 = scmp.lt.s32.totalorder %s54, 1
        %s864 = scalar_select %p863, %s54, 1
        %s865 = scalar_lea.vmem %s16, %s864
        %p866 = pneg %p447
        %p867 = pneg %p444
        %p868 = scmp.lt.s32.totalorder %s54, 1
        %s869 = scalar_select %p868, %s54, 1
        %s870 = smul.addr %s869, 8
        %s871 = smul.addr %s870, 4
        %s872 = scalar_lea.vmem %s17, %s871
        %p873 = pneg %p473
        %p874 = pneg %p470
        %p875 = scmp.lt.s32.totalorder %s54, 1
        %s876 = scalar_select %p875, %s54, 1
        %s877 = scalar_lea.vmem %s18, %s876
        %p878 = pneg %p499
        %p879 = pneg %p496
        %p880 = pneg %p520
        %p881 = pneg %p517
        %p882 = pneg %p541
        %p883 = pneg %p538
        %p884 = pneg %p567
        %p885 = pneg %p564
        %s886 = sand.u32 %s554, 1
        %s887 = scalar_lea.sflag [#allocation7], %s886
        %s888 = sand.u32 %s554, 1
        %s889 = smul.addr %s888, 8
        %s890 = scalar_lea.vmem [#allocation16], %s889
        %p891 = scmp.lt.s32.totalorder %s54, 1
        %s892 = scalar_select %p891, %s54, 1
        %s893 = scalar_lea.vmem %s7, %s892
        %p894 = scmp.lt.s32.totalorder %s54, 1
        %s895 = scalar_select %p894, %s54, 1
        %s896 = scalar_lea.vmem %s8, %s895
        %p897 = scmp.lt.s32.totalorder %s54, 1
        %s898 = scalar_select %p897, %s54, 1
        %s899 = smul.addr %s898, 4
        %s900 = smul.addr %s899, 4
        %s901 = scalar_lea.vmem %s9, %s900
        %p902 = scmp.lt.s32.totalorder %s54, 1
        %s903 = scalar_select %p902, %s54, 1
        %s904 = scalar_lea.vmem %s10, %s903
        %p905 = scmp.lt.s32.totalorder %s54, 1
        %s906 = scalar_select %p905, %s54, 1
        %s907 = smul.addr %s906, 4
        %s908 = smul.addr %s907, 4
        %s909 = scalar_lea.vmem %s11, %s908
        %p910 = scmp.lt.s32.totalorder %s54, 1
        %s911 = scalar_select %p910, %s54, 1
        %s912 = scalar_lea.vmem %s12, %s911
        %p913 = scmp.lt.s32.totalorder %s54, 1
        %s914 = scalar_select %p913, %s54, 1
        %s915 = scalar_lea.vmem %s13, %s914
        %p916 = scmp.lt.s32.totalorder %s54, 1
        %s917 = scalar_select %p916, %s54, 1
        %s918 = scalar_lea.vmem %s14, %s917
        %p919 = scmp.lt.s32.totalorder %s54, 1
        %s920 = scalar_select %p919, %s54, 1
        %s921 = smul.addr %s920, 4
        %s922 = smul.addr %s921, 4
        %s923 = scalar_lea.vmem %s15, %s922
        %p924 = scmp.lt.s32.totalorder %s54, 1
        %s925 = scalar_select %p924, %s54, 1
        %s926 = scalar_lea.vmem %s16, %s925
        %p927 = scmp.lt.s32.totalorder %s54, 1
        %s928 = scalar_select %p927, %s54, 1
        %s929 = smul.addr %s928, 8
        %s930 = smul.addr %s929, 4
        %s931 = scalar_lea.vmem %s17, %s930
        %p932 = scmp.lt.s32.totalorder %s54, 1
        %s933 = scalar_select %p932, %s54, 1
        %s934 = scalar_lea.vmem %s18, %s933
        %s936 = sld [smem:[#allocation4 + %s53]]
        %p937 = scmp.eq.s32.totalorder %s54, 0
        // Predicated region
        $region125: #{tpu_custom_call.1} parent=99 // pred_check
          %p938 = pneg %p937
        $region126: #{tpu_custom_call.1} parent=99 // pred_check_branch
          %940 = sbr.rel (%p938) target = $region128
        $region127: #{tpu_custom_call.1} parent=99 // pred_region
          %v941 = vld [vmem:[%s764] sm:$0xff]
          %v942 = vpack.c.bf16 %v941, %v941
          %v943 = vld [vmem:[#allocation8] sm:$0xf]
          %v944 = vld [vmem:[#allocation8 + $0x4] sm:$0xf]
          %v945 = vld [vmem:[#allocation8 + $0x8] sm:$0xf]
          %v946 = vld [vmem:[#allocation8 + $0xc] sm:$0xf]
          %v947 = vld [vmem:[%s3] sm:$0x1]
          %v949 = vperm.slane %v947, 0
          %v955 = vunpack.c.l.b16 %v943
          %v956 = vunpack.c.l.b16 %v944
          %v957 = vunpack.c.l.b16 %v945
          %v958 = vunpack.c.l.b16 %v946
          %v959 = vpack.c.b16 %v956, %v955
          %v960 = vpack.c.b16 %v958, %v957
          %vm963 = vcmask 261120
          %v965 = vsel %vm963, %v942, 0
          %967 = vmatpush.bf16.msra.mxu0 0
          %968 = vmatpush.bf16.msra.mxu0 0
          %969 = vmatpush.bf16.msra.mxu0 0
          %970 = vmatpush.bf16.msra.mxu0 0
          %971 = vmatpush.bf16.msra.mxu0 0
          %972 = vmatpush.bf16.msra.mxu0 0
          %973 = vmatpush.bf16.msra.mxu0 %v960
          %974 = vmatpush.bf16.msra.mxu0 %v959
          %975 = vmatmul.bf16.gmra.mxu0 %v965
          %v976 = vpop.f32.mrf.mxu0
          %v977 = vadd.f32 %v949, %v976
          %v978 = vpop.f32.mrf.mxu0
          %979 = vdwg.mxu0
          %v980 = vmul.f32 %v977, 5.656854
          %v981 = vld [vmem:[#allocation10] sm:$0xff]
          %v982 = vadd.f32 %v980, %v981
          %v983 = vld [vmem:[#allocation11] sm:$0x1]
          %v984 = vld [vmem:[#allocation13] sm:$0x1]
          %v985 = vsel %vm963, %v982, 0.0
          %986 = vadd.xlane.f32.xlu0 %v985
          %v987 = vpop.xlane.xlu0 %986
          %v988 = vrcp.pop 32.0
          %v989 = vmul.f32 32.0, %v988
          %v990 = vsub.f32 1.0, %v989
          %v991 = vmul.f32 %v988, %v990
          %v992 = vadd.f32 %v988, %v991
          %vm993 = vweird.f32 %v988
          %v994 = vsel %vm993, %v988, %v992
          %v995 = vmul.f32 %v987, %v994
          %v996 = vsub.f32 %v982, %v995
          %v997 = vmul.f32 %v996, %v996
          %v998 = vsel %vm963, %v997, 0.0
          %999 = vadd.xlane.f32.xlu0 %v998
          %v1000 = vpop.xlane.xlu0 %999
          %v1001 = vmul.f32 %v1000, %v994
          %v1002 = vadd.f32 %v1001, 1e-06
          %v1003 = vrsqrt.pop %v1002
          %v1004 = vmul.f32 %v1003, %v1002
          %v1005 = vmul.f32 %v1004, %v1003
          %v1006 = vmul.f32 0.5, %v1005
          %v1007 = vsub.f32 1.5, %v1006
          %v1008 = vmul.f32 %v1003, %v1007
          %vm1009 = vweird.f32 %v1002
          %vm1010 = vweird.f32 %v1003
          %vm1011 = vmor %vm1009, %vm1010
          %v1012 = vsel %vm1011, %v1003, %v1008
          %v1013 = vmul.f32 %v996, %v1012
          %v1015 = vperm.slane %v983, 0
          %v1017 = vmul.f32 %v1013, %v1015
          %v1019 = vperm.slane %v984, 0
          %v1021 = vadd.f32 %v1017, %v1019
          %1022 = vst.msk [vmem:[#allocation2] sm:$0xff] %vm963, %v1021
        $region128: #{tpu_custom_call.1} parent=99 // pred_fallthru
          _
        %v1023 = vld [vmem:[#allocation2] sm:$0xff]
        %v1024 = vld [vmem:[%s893] sm:$0x1]
        %v1025 = vld [vmem:[%s896] sm:$0x1]
        %vm1026 = vcmask 261120
        %v1027 = vsel %vm1026, %v1023, 0.0
        %1028 = vadd.xlane.f32.xlu0 %v1027
        %v1029 = vpop.xlane.xlu0 %1028
        %v1030 = vrcp.pop 32.0
        %v1031 = vmul.f32 32.0, %v1030
        %v1032 = vsub.f32 1.0, %v1031
        %v1033 = vmul.f32 %v1030, %v1032
        %v1034 = vadd.f32 %v1030, %v1033
        %vm1035 = vweird.f32 %v1030
        %v1036 = vsel %vm1035, %v1030, %v1034
        %v1037 = vmul.f32 %v1029, %v1036
        %v1038 = vsub.f32 %v1023, %v1037
        %v1039 = vmul.f32 %v1038, %v1038
        %v1040 = vsel %vm1026, %v1039, 0.0
        %1041 = vadd.xlane.f32.xlu0 %v1040
        %v1042 = vpop.xlane.xlu0 %1041
        %v1043 = vmul.f32 %v1042, %v1036
        %v1044 = vadd.f32 %v1043, 1e-06
        %v1045 = vrsqrt.pop %v1044
        %v1046 = vmul.f32 %v1045, %v1044
        %v1047 = vmul.f32 %v1046, %v1045
        %v1048 = vmul.f32 0.5, %v1047
        %v1049 = vsub.f32 1.5, %v1048
        %v1050 = vmul.f32 %v1045, %v1049
        %vm1051 = vweird.f32 %v1044
        %vm1052 = vweird.f32 %v1045
        %vm1053 = vmor %vm1051, %vm1052
        %v1054 = vsel %vm1053, %v1045, %v1050
        %v1055 = vmul.f32 %v1038, %v1054
        %v1057 = vperm.slane %v1024, 0
        %v1059 = vmul.f32 %v1055, %v1057
        %v1061 = vperm.slane %v1025, 0
        %v1063 = vadd.f32 %v1059, %v1061
        %v1064 = vpack.c.bf16 %v1063, %v1063
        %v1065 = vld [vmem:[%s901] sm:$0xf]
        %v1066 = vld [vmem:[%s901 + $0x4] sm:$0xf]
        %v1067 = vld [vmem:[%s901 + $0x8] sm:$0xf]
        %v1068 = vld [vmem:[%s901 + $0xc] sm:$0xf]
        %v1069 = vld [vmem:[%s904] sm:$0x1]
        %v1071 = vperm.slane %v1069, 0
        %v1077 = vunpack.c.l.b16 %v1065
        %v1078 = vunpack.c.l.b16 %v1066
        %v1079 = vunpack.c.l.b16 %v1067
        %v1080 = vunpack.c.l.b16 %v1068
        %v1081 = vpack.c.b16 %v1078, %v1077
        %v1082 = vpack.c.b16 %v1080, %v1079
        %v1086 = vsel %vm1026, %v1064, 0
        %1088 = vmatpush.bf16.msra.mxu0 0
        %1089 = vmatpush.bf16.msra.mxu0 0
        %1090 = vmatpush.bf16.msra.mxu0 0
        %1091 = vmatpush.bf16.msra.mxu0 0
        %1092 = vmatpush.bf16.msra.mxu0 0
        %1093 = vmatpush.bf16.msra.mxu0 0
        %1094 = vmatpush.bf16.msra.mxu0 %v1082
        %1095 = vmatpush.bf16.msra.mxu0 %v1081
        %1096 = vmatmul.bf16.gmra.mxu0 %v1086
        %v1097 = vpop.f32.mrf.mxu0
        %v1098 = vadd.f32 %v1071, %v1097
        %v1099 = vpop.f32.mrf.mxu0
        %1100 = vdwg.mxu0
        %v1101 = vlaneseq
        %v1102 = vand.u32 %v1101, 127
        %v1103 = vstv %s936
        %vm1104 = vcmp.lt.s32.totalorder %v1102, %v1103
        %1106 = vrot.lane.b32.xlu0 %v1098, 96
        %v1107 = vpop.permute.xlu0 %1106
        %vm1108 = vcmask 64512
        %v1109 = vsel %vm1108, %v1098, 0
        %v1111 = vsel %vm1108, %v1107, 0
        %1113 = vmatpush.xpose.msra.mxu0 0.0
        %1114 = vmatpush.xpose.msra.mxu0 0.0
        %1115 = vmatpush.xpose.msra.mxu0 0.0
        %1116 = vmatpush.xpose.msra.mxu0 0.0
        %1117 = vmatpush.xpose.msra.mxu0 0.0
        %1118 = vmatpush.xpose.msra.mxu0 0.0
        %1119 = vmatpush.xpose.msra.mxu0 0.0
        %1120 = vmatpush.xpose.msra.mxu0 0.0
        %1121 = vmatpush.xpose.msra.mxu0 0.0
        %1122 = vmatpush.xpose.msra.mxu0 0.0
        %1123 = vmatpush.xpose.msra.mxu0 0.0
        %1124 = vmatpush.xpose.msra.mxu0 0.0
        %1125 = vmatpush.xpose.msra.mxu0 0.0
        %1126 = vmatpush.xpose.msra.mxu0 0.0
        %1127 = vmatpush.xpose.msra.mxu0 0.0
        %1128 = vmatpush.xpose.msra.mxu0 %v1111
        %1129 = vmatmul.f32.gmra.mxu0 %v1109
        %v1130 = vpop.f32.mrf.mxu0
        %v1131 = vadd.f32 0.0, %v1130
        %1132 = vdwg.mxu0
        %v1133 = vmul.f32 %v1131, 0.35355338
        %v1134 = vsel %vm1104, %v1133, -1e+09
        %v1135 = vsel %vm1108, %v1134, -inf
        %1136 = vmax.xlane.f32.xlu0 %v1135
        %v1137 = vpop.xlane.xlu0 %1136
        %v1138 = vsub.f32 %v1134, %v1137
        %v1139 = vmul.f32 %v1138, 1.442695
        %v1140 = vpow.pop %v1139
        %v1141 = vsel %vm1108, %v1140, 0.0
        %1142 = vadd.xlane.f32.xlu0 %v1141
        %v1143 = vpop.xlane.xlu0 %1142
        %v1144 = vrcp.pop %v1143
        %v1145 = vmul.f32 %v1140, %v1144
        %1146 = vrot.lane.b32.xlu0 %v1098, 64
        %v1147 = vpop.permute.xlu0 %1146
        %v1150 = vsel %vm1108, %v1145, 0
        %1152 = vmatpush.msra.mxu0 0.0
        %1153 = vmatpush.msra.mxu0 0.0
        %1154 = vmatpush.msra.mxu0 0.0
        %1155 = vmatpush.msra.mxu0 0.0
        %1156 = vmatpush.msra.mxu0 0.0
        %1157 = vmatpush.msra.mxu0 0.0
        %1158 = vmatpush.msra.mxu0 0.0
        %1159 = vmatpush.msra.mxu0 0.0
        %1160 = vmatpush.msra.mxu0 0.0
        %1161 = vmatpush.msra.mxu0 0.0
        %1162 = vmatpush.msra.mxu0 0.0
        %1163 = vmatpush.msra.mxu0 0.0
        %1164 = vmatpush.msra.mxu0 0.0
        %1165 = vmatpush.msra.mxu0 0.0
        %1166 = vmatpush.msra.mxu0 0.0
        %1167 = vmatpush.msra.mxu0 %v1147
        %1168 = vmatmul.f32.gmra.mxu0 %v1150
        %v1169 = vpop.f32.mrf.mxu0
        %v1170 = vadd.f32 0.0, %v1169
        %1171 = vdwg.mxu0
        %1172 = vrot.lane.b32.xlu0 %v1098, 120
        %v1173 = vpop.permute.xlu0 %1172
        %1174 = vrot.lane.b32.xlu0 %v1098, 88
        %v1175 = vpop.permute.xlu0 %1174
        %v1176 = vsel %vm1108, %v1173, 0
        %v1178 = vsel %vm1108, %v1175, 0
        %1180 = vmatpush.xpose.msra.mxu0 0.0
        %1181 = vmatpush.xpose.msra.mxu0 0.0
        %1182 = vmatpush.xpose.msra.mxu0 0.0
        %1183 = vmatpush.xpose.msra.mxu0 0.0
        %1184 = vmatpush.xpose.msra.mxu0 0.0
        %1185 = vmatpush.xpose.msra.mxu0 0.0
        %1186 = vmatpush.xpose.msra.mxu0 0.0
        %1187 = vmatpush.xpose.msra.mxu0 0.0
        %1188 = vmatpush.xpose.msra.mxu0 0.0
        %1189 = vmatpush.xpose.msra.mxu0 0.0
        %1190 = vmatpush.xpose.msra.mxu0 0.0
        %1191 = vmatpush.xpose.msra.mxu0 0.0
        %1192 = vmatpush.xpose.msra.mxu0 0.0
        %1193 = vmatpush.xpose.msra.mxu0 0.0
        %1194 = vmatpush.xpose.msra.mxu0 0.0
        %1195 = vmatpush.xpose.msra.mxu0 %v1178
        %1196 = vmatmul.f32.gmra.mxu0 %v1176
        %v1197 = vpop.f32.mrf.mxu0
        %v1198 = vadd.f32 0.0, %v1197
        %1199 = vdwg.mxu0
        %v1200 = vmul.f32 %v1198, 0.35355338
        %v1201 = vsel %vm1104, %v1200, -1e+09
        %v1202 = vsel %vm1108, %v1201, -inf
        %1203 = vmax.xlane.f32.xlu0 %v1202
        %v1204 = vpop.xlane.xlu0 %1203
        %v1205 = vsub.f32 %v1201, %v1204
        %v1206 = vmul.f32 %v1205, 1.442695
        %v1207 = vpow.pop %v1206
        %v1208 = vsel %vm1108, %v1207, 0.0
        %1209 = vadd.xlane.f32.xlu0 %v1208
        %v1210 = vpop.xlane.xlu0 %1209
        %v1211 = vrcp.pop %v1210
        %v1212 = vmul.f32 %v1207, %v1211
        %1213 = vrot.lane.b32.xlu0 %v1098, 56
        %v1214 = vpop.permute.xlu0 %1213
        %v1217 = vsel %vm1108, %v1212, 0
        %1219 = vmatpush.msra.mxu0 0.0
        %1220 = vmatpush.msra.mxu0 0.0
        %1221 = vmatpush.msra.mxu0 0.0
        %1222 = vmatpush.msra.mxu0 0.0
        %1223 = vmatpush.msra.mxu0 0.0
        %1224 = vmatpush.msra.mxu0 0.0
        %1225 = vmatpush.msra.mxu0 0.0
        %1226 = vmatpush.msra.mxu0 0.0
        %1227 = vmatpush.msra.mxu0 0.0
        %1228 = vmatpush.msra.mxu0 0.0
        %1229 = vmatpush.msra.mxu0 0.0
        %1230 = vmatpush.msra.mxu0 0.0
        %1231 = vmatpush.msra.mxu0 0.0
        %1232 = vmatpush.msra.mxu0 0.0
        %1233 = vmatpush.msra.mxu0 0.0
        %1234 = vmatpush.msra.mxu0 %v1214
        %1235 = vmatmul.f32.gmra.mxu0 %v1217
        %v1236 = vpop.f32.mrf.mxu0
        %v1237 = vadd.f32 0.0, %v1236
        %1238 = vdwg.mxu0
        %1239 = vrot.lane.b32.xlu0 %v1098, 112
        %v1240 = vpop.permute.xlu0 %1239
        %1241 = vrot.lane.b32.xlu0 %v1098, 80
        %v1242 = vpop.permute.xlu0 %1241
        %v1243 = vsel %vm1108, %v1240, 0
        %v1245 = vsel %vm1108, %v1242, 0
        %1247 = vmatpush.xpose.msra.mxu0 0.0
        %1248 = vmatpush.xpose.msra.mxu0 0.0
        %1249 = vmatpush.xpose.msra.mxu0 0.0
        %1250 = vmatpush.xpose.msra.mxu0 0.0
        %1251 = vmatpush.xpose.msra.mxu0 0.0
        %1252 = vmatpush.xpose.msra.mxu0 0.0
        %1253 = vmatpush.xpose.msra.mxu0 0.0
        %1254 = vmatpush.xpose.msra.mxu0 0.0
        %1255 = vmatpush.xpose.msra.mxu0 0.0
        %1256 = vmatpush.xpose.msra.mxu0 0.0
        %1257 = vmatpush.xpose.msra.mxu0 0.0
        %1258 = vmatpush.xpose.msra.mxu0 0.0
        %1259 = vmatpush.xpose.msra.mxu0 0.0
        %1260 = vmatpush.xpose.msra.mxu0 0.0
        %1261 = vmatpush.xpose.msra.mxu0 0.0
        %1262 = vmatpush.xpose.msra.mxu0 %v1245
        %1263 = vmatmul.f32.gmra.mxu0 %v1243
        %v1264 = vpop.f32.mrf.mxu0
        %v1265 = vadd.f32 0.0, %v1264
        %1266 = vdwg.mxu0
        %v1267 = vmul.f32 %v1265, 0.35355338
        %v1268 = vsel %vm1104, %v1267, -1e+09
        %v1269 = vsel %vm1108, %v1268, -inf
        %1270 = vmax.xlane.f32.xlu0 %v1269
        %v1271 = vpop.xlane.xlu0 %1270
        %v1272 = vsub.f32 %v1268, %v1271
        %v1273 = vmul.f32 %v1272, 1.442695
        %v1274 = vpow.pop %v1273
        %v1275 = vsel %vm1108, %v1274, 0.0
        %1276 = vadd.xlane.f32.xlu0 %v1275
        %v1277 = vpop.xlane.xlu0 %1276
        %v1278 = vrcp.pop %v1277
        %v1279 = vmul.f32 %v1274, %v1278
        %1280 = vrot.lane.b32.xlu0 %v1098, 48
        %v1281 = vpop.permute.xlu0 %1280
        %v1284 = vsel %vm1108, %v1279, 0
        %1286 = vmatpush.msra.mxu0 0.0
        %1287 = vmatpush.msra.mxu0 0.0
        %1288 = vmatpush.msra.mxu0 0.0
        %1289 = vmatpush.msra.mxu0 0.0
        %1290 = vmatpush.msra.mxu0 0.0
        %1291 = vmatpush.msra.mxu0 0.0
        %1292 = vmatpush.msra.mxu0 0.0
        %1293 = vmatpush.msra.mxu0 0.0
        %1294 = vmatpush.msra.mxu0 0.0
        %1295 = vmatpush.msra.mxu0 0.0
        %1296 = vmatpush.msra.mxu0 0.0
        %1297 = vmatpush.msra.mxu0 0.0
        %1298 = vmatpush.msra.mxu0 0.0
        %1299 = vmatpush.msra.mxu0 0.0
        %1300 = vmatpush.msra.mxu0 0.0
        %1301 = vmatpush.msra.mxu0 %v1281
        %1302 = vmatmul.f32.gmra.mxu0 %v1284
        %v1303 = vpop.f32.mrf.mxu0
        %v1304 = vadd.f32 0.0, %v1303
        %1305 = vdwg.mxu0
        %1306 = vrot.lane.b32.xlu0 %v1098, 104
        %v1307 = vpop.permute.xlu0 %1306
        %1308 = vrot.lane.b32.xlu0 %v1098, 72
        %v1309 = vpop.permute.xlu0 %1308
        %v1310 = vsel %vm1108, %v1307, 0
        %v1312 = vsel %vm1108, %v1309, 0
        %1314 = vmatpush.xpose.msra.mxu0 0.0
        %1315 = vmatpush.xpose.msra.mxu0 0.0
        %1316 = vmatpush.xpose.msra.mxu0 0.0
        %1317 = vmatpush.xpose.msra.mxu0 0.0
        %1318 = vmatpush.xpose.msra.mxu0 0.0
        %1319 = vmatpush.xpose.msra.mxu0 0.0
        %1320 = vmatpush.xpose.msra.mxu0 0.0
        %1321 = vmatpush.xpose.msra.mxu0 0.0
        %1322 = vmatpush.xpose.msra.mxu0 0.0
        %1323 = vmatpush.xpose.msra.mxu0 0.0
        %1324 = vmatpush.xpose.msra.mxu0 0.0
        %1325 = vmatpush.xpose.msra.mxu0 0.0
        %1326 = vmatpush.xpose.msra.mxu0 0.0
        %1327 = vmatpush.xpose.msra.mxu0 0.0
        %1328 = vmatpush.xpose.msra.mxu0 0.0
        %1329 = vmatpush.xpose.msra.mxu0 %v1312
        %1330 = vmatmul.f32.gmra.mxu0 %v1310
        %v1331 = vpop.f32.mrf.mxu0
        %v1332 = vadd.f32 0.0, %v1331
        %1333 = vdwg.mxu0
        %v1334 = vmul.f32 %v1332, 0.35355338
        %v1335 = vsel %vm1104, %v1334, -1e+09
        %v1336 = vsel %vm1108, %v1335, -inf
        %1337 = vmax.xlane.f32.xlu0 %v1336
        %v1338 = vpop.xlane.xlu0 %1337
        %v1339 = vsub.f32 %v1335, %v1338
        %v1340 = vmul.f32 %v1339, 1.442695
        %v1341 = vpow.pop %v1340
        %v1342 = vsel %vm1108, %v1341, 0.0
        %1343 = vadd.xlane.f32.xlu0 %v1342
        %v1344 = vpop.xlane.xlu0 %1343
        %v1345 = vrcp.pop %v1344
        %v1346 = vmul.f32 %v1341, %v1345
        %1347 = vrot.lane.b32.xlu0 %v1098, 40
        %v1348 = vpop.permute.xlu0 %1347
        %v1351 = vsel %vm1108, %v1346, 0
        %1353 = vmatpush.msra.mxu0 0.0
        %1354 = vmatpush.msra.mxu0 0.0
        %1355 = vmatpush.msra.mxu0 0.0
        %1356 = vmatpush.msra.mxu0 0.0
        %1357 = vmatpush.msra.mxu0 0.0
        %1358 = vmatpush.msra.mxu0 0.0
        %1359 = vmatpush.msra.mxu0 0.0
        %1360 = vmatpush.msra.mxu0 0.0
        %1361 = vmatpush.msra.mxu0 0.0
        %1362 = vmatpush.msra.mxu0 0.0
        %1363 = vmatpush.msra.mxu0 0.0
        %1364 = vmatpush.msra.mxu0 0.0
        %1365 = vmatpush.msra.mxu0 0.0
        %1366 = vmatpush.msra.mxu0 0.0
        %1367 = vmatpush.msra.mxu0 0.0
        %1368 = vmatpush.msra.mxu0 %v1348
        %1369 = vmatmul.f32.gmra.mxu0 %v1351
        %v1370 = vpop.f32.mrf.mxu0
        %v1371 = vadd.f32 0.0, %v1370
        %1372 = vdwg.mxu0
        %1374 = vrot.lane.b32.xlu0 %v1237, 8
        %v1375 = vpop.permute.xlu0 %1374
        %1378 = vrot.lane.b32.xlu0 %v1304, 16
        %v1379 = vpop.permute.xlu0 %1378
        %1382 = vrot.lane.b32.xlu0 %v1371, 24
        %v1383 = vpop.permute.xlu0 %1382
        %v1385 = vsel %vm1108, %v1170, %v1375
        %vm1386 = vcmask 130048
        %v1387 = vsel %vm1386, %v1385, %v1379
        %vm1388 = vcmask 195584
        %v1389 = vsel %vm1388, %v1387, %v1383
        %v1390 = vpack.c.bf16 %v1389, %v1389
        %v1391 = vld [vmem:[%s909] sm:$0xf]
        %v1392 = vld [vmem:[%s909 + $0x4] sm:$0xf]
        %v1393 = vld [vmem:[%s909 + $0x8] sm:$0xf]
        %v1394 = vld [vmem:[%s909 + $0xc] sm:$0xf]
        %v1395 = vld [vmem:[%s912] sm:$0x1]
        %v1397 = vperm.slane %v1395, 0
        %v1403 = vunpack.c.l.b16 %v1391
        %v1404 = vunpack.c.l.b16 %v1392
        %v1405 = vunpack.c.l.b16 %v1393
        %v1406 = vunpack.c.l.b16 %v1394
        %v1407 = vpack.c.b16 %v1404, %v1403
        %v1408 = vpack.c.b16 %v1406, %v1405
        %v1412 = vsel %vm1026, %v1390, 0
        %1414 = vmatpush.bf16.msra.mxu0 0
        %1415 = vmatpush.bf16.msra.mxu0 0
        %1416 = vmatpush.bf16.msra.mxu0 0
        %1417 = vmatpush.bf16.msra.mxu0 0
        %1418 = vmatpush.bf16.msra.mxu0 0
        %1419 = vmatpush.bf16.msra.mxu0 0
        %1420 = vmatpush.bf16.msra.mxu0 %v1408
        %1421 = vmatpush.bf16.msra.mxu0 %v1407
        %1422 = vmatmul.bf16.gmra.mxu0 %v1412
        %v1423 = vpop.f32.mrf.mxu0
        %v1424 = vadd.f32 %v1397, %v1423
        %v1425 = vpop.f32.mrf.mxu0
        %1426 = vdwg.mxu0
        %v1427 = vadd.f32 %v1023, %v1424
        %v1428 = vld [vmem:[%s915] sm:$0x1]
        %v1429 = vld [vmem:[%s918] sm:$0x1]
        %v1430 = vsel %vm1026, %v1427, 0.0
        %1431 = vadd.xlane.f32.xlu0 %v1430
        %v1432 = vpop.xlane.xlu0 %1431
        %v1433 = vmul.f32 %v1432, %v1036
        %v1434 = vsub.f32 %v1427, %v1433
        %v1435 = vmul.f32 %v1434, %v1434
        %v1436 = vsel %vm1026, %v1435, 0.0
        %1437 = vadd.xlane.f32.xlu0 %v1436
        %v1438 = vpop.xlane.xlu0 %1437
        %v1439 = vmul.f32 %v1438, %v1036
        %v1440 = vadd.f32 %v1439, 1e-06
        %v1441 = vrsqrt.pop %v1440
        %v1442 = vmul.f32 %v1441, %v1440
        %v1443 = vmul.f32 %v1442, %v1441
        %v1444 = vmul.f32 0.5, %v1443
        %v1445 = vsub.f32 1.5, %v1444
        %v1446 = vmul.f32 %v1441, %v1445
        %vm1447 = vweird.f32 %v1440
        %vm1448 = vweird.f32 %v1441
        %vm1449 = vmor %vm1447, %vm1448
        %v1450 = vsel %vm1449, %v1441, %v1446
        %v1451 = vmul.f32 %v1434, %v1450
        %v1453 = vperm.slane %v1428, 0
        %v1455 = vmul.f32 %v1451, %v1453
        %v1457 = vperm.slane %v1429, 0
        %v1459 = vadd.f32 %v1455, %v1457
        %v1460 = vpack.c.bf16 %v1459, %v1459
        %v1461 = vld [vmem:[%s923] sm:$0xf]
        %v1462 = vld [vmem:[%s923 + $0x4] sm:$0xf]
        %v1463 = vld [vmem:[%s923 + $0x8] sm:$0xf]
        %v1464 = vld [vmem:[%s923 + $0xc] sm:$0xf]
        %v1465 = vld [vmem:[%s926] sm:$0x1]
        %v1467 = vperm.slane %v1465, 0
        %v1473 = vunpack.c.l.b16 %v1461
        %v1474 = vunpack.c.l.b16 %v1462
        %v1475 = vunpack.c.l.b16 %v1463
        %v1476 = vunpack.c.l.b16 %v1464
        %v1477 = vpack.c.b16 %v1474, %v1473
        %v1478 = vpack.c.b16 %v1476, %v1475
        %v1482 = vsel %vm1026, %v1460, 0
        %1484 = vmatpush.bf16.msra.mxu0 0
        %1485 = vmatpush.bf16.msra.mxu0 0
        %1486 = vmatpush.bf16.msra.mxu0 0
        %1487 = vmatpush.bf16.msra.mxu0 0
        %1488 = vmatpush.bf16.msra.mxu0 0
        %1489 = vmatpush.bf16.msra.mxu0 0
        %1490 = vmatpush.bf16.msra.mxu0 %v1478
        %1491 = vmatpush.bf16.msra.mxu0 %v1477
        %1492 = vmatmul.bf16.gmra.mxu0 %v1482
        %v1493 = vpop.f32.mrf.mxu0
        %v1494 = vadd.f32 %v1467, %v1493
        %v1495 = vpop.f32.mrf.mxu0
        %1496 = vdwg.mxu0
        %v1497 = vmax.f32 %v1494, 0.0
        %v1498 = vpack.c.bf16 %v1497, %v1497
        %v1499 = vld [vmem:[%s931] sm:$0xf]
        %v1500 = vld [vmem:[%s931 + $0x4] sm:$0xf]
        %v1501 = vld [vmem:[%s931 + $0x8] sm:$0xf]
        %v1502 = vld [vmem:[%s931 + $0xc] sm:$0xf]
        %v1503 = vld [vmem:[%s931 + $0x10] sm:$0xf]
        %v1504 = vld [vmem:[%s931 + $0x14] sm:$0xf]
        %v1505 = vld [vmem:[%s931 + $0x18] sm:$0xf]
        %v1506 = vld [vmem:[%s931 + $0x1c] sm:$0xf]
        %v1507 = vld [vmem:[%s934] sm:$0x1]
        %v1509 = vperm.slane %v1507, 0
        %v1519 = vunpack.c.l.b16 %v1499
        %v1520 = vunpack.c.l.b16 %v1500
        %v1521 = vunpack.c.l.b16 %v1501
        %v1522 = vunpack.c.l.b16 %v1502
        %v1523 = vunpack.c.l.b16 %v1503
        %v1524 = vunpack.c.l.b16 %v1504
        %v1525 = vunpack.c.l.b16 %v1505
        %v1526 = vunpack.c.l.b16 %v1506
        %v1527 = vpack.c.b16 %v1520, %v1519
        %v1528 = vpack.c.b16 %v1522, %v1521
        %v1529 = vpack.c.b16 %v1524, %v1523
        %v1530 = vpack.c.b16 %v1526, %v1525
        %vm1535 = vcmask 523264
        %v1537 = vsel %vm1535, %v1498, 0
        %1539 = vmatpush.bf16.msra.mxu0 0
        %1540 = vmatpush.bf16.msra.mxu0 0
        %1541 = vmatpush.bf16.msra.mxu0 0
        %1542 = vmatpush.bf16.msra.mxu0 0
        %1543 = vmatpush.bf16.msra.mxu0 %v1530
        %1544 = vmatpush.bf16.msra.mxu0 %v1529
        %1545 = vmatpush.bf16.msra.mxu0 %v1528
        %1546 = vmatpush.bf16.msra.mxu0 %v1527
        %1547 = vmatmul.bf16.gmra.mxu0 %v1537
        %v1548 = vpop.f32.mrf.mxu0
        %v1549 = vadd.f32 %v1509, %v1548
        %v1550 = vpop.f32.mrf.mxu0
        %1551 = vdwg.mxu0
        %v1552 = vadd.f32 %v1427, %v1549
        %1553 = vst.msk [vmem:[#allocation2] sm:$0xff] %vm1026, %v1552
        %p1554 = scmp.eq.s32.totalorder %s54, 1
        // Predicated region
        $region129: #{tpu_custom_call.1} parent=99 // pred_check
          %p1555 = pneg %p1554
        $region130: #{tpu_custom_call.1} parent=99 // pred_check_branch
          %1557 = sbr.rel (%p1555) target = $region132
        $region131: #{tpu_custom_call.1} parent=99 // pred_region
          %v1558 = vld [vmem:[#allocation14] sm:$0x1]
          %v1559 = vld [vmem:[%s20] sm:$0x1]
          %v1560 = vsel %vm1026, %v1552, 0.0
          %1561 = vadd.xlane.f32.xlu0 %v1560
          %v1562 = vpop.xlane.xlu0 %1561
          %v1563 = vmul.f32 %v1562, %v1036
          %v1564 = vsub.f32 %v1552, %v1563
          %v1565 = vmul.f32 %v1564, %v1564
          %v1566 = vsel %vm1026, %v1565, 0.0
          %1567 = vadd.xlane.f32.xlu0 %v1566
          %v1568 = vpop.xlane.xlu0 %1567
          %v1569 = vmul.f32 %v1568, %v1036
          %v1570 = vadd.f32 %v1569, 1e-06
          %v1571 = vrsqrt.pop %v1570
          %v1572 = vmul.f32 %v1571, %v1570
          %v1573 = vmul.f32 %v1572, %v1571
          %v1574 = vmul.f32 0.5, %v1573
          %v1575 = vsub.f32 1.5, %v1574
          %v1576 = vmul.f32 %v1571, %v1575
          %vm1577 = vweird.f32 %v1570
          %vm1578 = vweird.f32 %v1571
          %vm1579 = vmor %vm1577, %vm1578
          %v1580 = vsel %vm1579, %v1571, %v1576
          %v1581 = vmul.f32 %v1564, %v1580
          %v1583 = vperm.slane %v1558, 0
          %v1585 = vmul.f32 %v1581, %v1583
          %v1587 = vperm.slane %v1559, 0
          %v1589 = vadd.f32 %v1585, %v1587
          %1590 = vst.msk [vmem:[%s890] sm:$0xff] %vm1026, %v1589
        $region132: #{tpu_custom_call.1} parent=99 // pred_fallthru
          _
        %s1591 = sand.u32 %s554, 1
        %s1592 = scalar_lea.sflag [#allocation7], %s1591
        %s1593 = sand.u32 %s554, 1
        %s1594 = smul.addr %s1593, 8
        %s1595 = scalar_lea.vmem [#allocation16], %s1594
        // Predicated region
        $region133: #{tpu_custom_call.1} parent=99 // pred_check
          %p1596 = pneg %p564
        $region134: #{tpu_custom_call.1} parent=99 // pred_check_branch
          %1598 = sbr.rel (%p1596) target = $region136
        $region135: #{tpu_custom_call.1} parent=99 // pred_region
          %1600 = vsyncadd %s1592, 0
          %s1601 = smul.addr %s53, 8
          %s1602 = scalar_lea.hbm %s21, %s1601
          %s1604 = sshll.u32 %s1595, 4
          %s1605 = int_to_ptr.vmem [resolvable:$true] %s1604
          %s1606 = sshll.u32 %s1602, 4
          %s1607 = int_to_ptr.hbm [resolvable:$true] %s1606
          %1609 = dma.vmem_to_hbm [thread:$0]  %s1605, 128, %s1607, %s1592
        $region136: #{tpu_custom_call.1} parent=99 // pred_fallthru
          _
      $region100: #{tpu_custom_call.1} parent=5 // pred_fallthru
        _
      %p1610 = scmp.le.s32.totalorder 2, %s44
      // Predicated region
      $region137: #{tpu_custom_call.1} parent=5 // pred_check
        %p1611 = pneg %p1610
      $region138: #{tpu_custom_call.1} parent=5 // pred_check_branch
        %1613 = sbr.rel (%p1611) target = $region140
      $region139: #{tpu_custom_call.1} parent=5 // pred_region
        %s1614 = ssub.s32 %s44, 2
        // Predicated region
        $region141: #{tpu_custom_call.1} parent=139 // pred_check
          %p1615 = pneg %p570
        $region142: #{tpu_custom_call.1} parent=139 // pred_check_branch
          %1617 = sbr.rel (%p1615) target = $region144
        $region143: #{tpu_custom_call.1} parent=139 // pred_region
          %s1618 = sand.u32 %s555, 1
          %s1619 = scalar_lea.sflag [#allocation7], %s1618
          %s1620 = sand.u32 %s555, 1
          %s1621 = smul.addr %s1620, 8
          %s1622 = scalar_lea.vmem [#allocation16], %s1621
          %1624 = dma.done %s1619, 128
        $region144: #{tpu_custom_call.1} parent=139 // pred_fallthru
          _
      $region140: #{tpu_custom_call.1} parent=5 // pred_fallthru
        _
    $region6: #{tpu_custom_call.1} parent=1 // loop_footer
      %s48 = sadd.s32 1, %s44
    $region7: #{tpu_custom_call.1} parent=1 // loop_footer_branch
      %43 = sbr.rel target = $region3
    $region8: #{tpu_custom_call.1} parent=1 // loop_exit
      _
    %1625 = vsyncpa [#allocation6], 1
    %s1626 = scalar_lea.sflag [#allocation6], 1
    %1627 = vsyncpa %s1626, 1
    %1628 = vsyncpa [#allocation9], 1
    %1629 = vsyncpa [#allocation12], 1
    %1630 = vsyncpa [#allocation15], 1
    %1631 = vsyncpa [#allocation7], 1
    %s1632 = scalar_lea.sflag [#allocation7], 1
    %1633 = vsyncpa %s1632, 1

</llo_original>
